<compile_context>
chip_gen: v5e
topology: v5e:2x2
jax: 0.10.0
libtpu: 0.0.40
codegen_flags: <defaults>
</compile_context>

<pallas_src>
import math
import numpy as np
import jax
import jax.numpy as jnp
from jax import lax
from jax.experimental import pallas as pl
from jax.experimental.pallas import tpu as pltpu


# --------------------------------------------------------------------------
# Fused forward kernel
# --------------------------------------------------------------------------
def fused_kernel(u2_ref, wih_ref, whh_ref, bih_ref, bhh_ref,
                 wq_ref, bq_ref, wk_ref, bk_ref,
                 nmask_ref, rm0_ref, rm1_ref,
                 w1c_ref, w2c_ref, wl_ref, bl_ref, wsp_ref, bsp_ref,
                 scores_ref, feat_ref, logp_ref,
                 emo_ref):
    f32 = jnp.float32
    bf16 = jnp.bfloat16
    B, T, Hg = emo_ref.shape
    TB = B * T

    def mxdot(a, b):
        # bf16 MXU operands, f32 accumulation (weights are already bf16)
        return jnp.dot(a.astype(bf16), b, preferred_element_type=f32)

    # ---- 1) TransGRU stand-in: hoisted input projection + fully unrolled time loop
    u = u2_ref[...]                                     # (T*B, D_e), row = t*B + b
    gi_r = mxdot(u, wih_ref[0]) + bih_ref[0]            # (T*B, Hg)
    gi_z = mxdot(u, wih_ref[1]) + bih_ref[1]
    gi_n = mxdot(u, wih_ref[2]) + bih_ref[2]
    whr, whz, whn = whh_ref[0], whh_ref[1], whh_ref[2]
    bhr, bhz, bhn = bhh_ref[0], bhh_ref[1], bhh_ref[2]

    h = jnp.zeros((B, Hg), f32)
    for t in range(T):                                  # static unroll (T is small)
        lo = t * B
        ghr = mxdot(h, whr) + bhr                       # (B, Hg) per-gate, lane-aligned
        ghz = mxdot(h, whz) + bhz
        ghn = mxdot(h, whn) + bhn
        r = jax.nn.sigmoid(gi_r[lo:lo + B] + ghr)
        z = jax.nn.sigmoid(gi_z[lo:lo + B] + ghz)
        n = jnp.tanh(gi_n[lo:lo + B] + r * ghn)
        h = (1.0 - z) * n + z * h
        emo_ref[:, t:t + 1, :] = h.reshape(B, 1, Hg)    # buffer in VMEM scratch

    emo = emo_ref[...]                                  # (B, T, Hg) node-slot layout
    x_slots = emo.reshape(TB, Hg)                       # slot = b*T + t

    # ---- 2) MaskedEdgeAttention scores: whole batch in one body, no k.T transpose
    q = mxdot(x_slots, wq_ref[...]) + bq_ref[...]       # (TB, Hg)
    k = mxdot(x_slots, wk_ref[...]) + bk_ref[...]
    qb = q.reshape(B, T, Hg)
    kb = k.reshape(B, T, Hg)
    s = lax.dot_general(qb, kb, (((2,), (2,)), ((0,), (0,))),
                        preferred_element_type=f32) * (1.0 / math.sqrt(Hg))  # (B,T,T)
    msk = nmask_ref[...] > 0.0
    neg = jnp.where(msk, s, -1e30)
    rowmax = jnp.max(neg, axis=-1, keepdims=True)
    e = jnp.where(msk, jnp.exp(neg - rowmax), 0.0)      # exp arg <= 0, never overflows
    denom = jnp.sum(e, axis=-1, keepdims=True)
    inv = pl.reciprocal(jnp.maximum(denom, 1e-20), approx=True)
    scores = e * inv                                    # rows w/o neighbours stay 0
    scores_ref[...] = scores

    # ---- 3) block-diagonal relational adjacency (scores * host (2/deg) masks)
    #         + 2 GGCN layers with K=128 fused relation matmuls
    a0 = scores * rm0_ref[...]                          # (B, T, T)
    a1 = scores * rm1_ref[...]

    def bmm(a, v):                                      # per-dialogue aggregation
        return lax.dot_general(a, v, (((2,), (1,)), ((0,), (0,))),
                               preferred_element_type=f32)

    m0 = bmm(a0, emo).reshape(TB, Hg)
    m1 = bmm(a1, emo).reshape(TB, Hg)
    mcat = jnp.concatenate([m0, m1], axis=-1)           # (TB, 2*Hg): K = 128
    out1 = jax.nn.sigmoid(mxdot(mcat, w1c_ref[...]))    # dropout = identity (eval)

    o1b = out1.reshape(B, T, Hg)
    n0 = bmm(a0, o1b).reshape(TB, Hg)
    n1 = bmm(a1, o1b).reshape(TB, Hg)
    ncat = jnp.concatenate([n0, n1], axis=-1)
    out2 = mxdot(ncat, w2c_ref[...])                    # (TB, Hg)

    # ---- 4) classifier on concat(x, out2) (K=128) + lane-padded log-softmax
    feat = jnp.concatenate([x_slots, out2], axis=-1)    # (TB, 2*Hg) = emotions
    feat_ref[...] = feat
    hidden = jnp.maximum(mxdot(feat, wl_ref[...]) + bl_ref[...], 0.0)
    logits = mxdot(hidden, wsp_ref[...]) + bsp_ref[...] # (TB, 128); pad cols = -1e30
    mx = jnp.max(logits, axis=-1, keepdims=True)
    ex = jnp.exp(logits - mx)                           # pad columns underflow to 0
    lse = jnp.log(jnp.sum(ex, axis=-1, keepdims=True)) + mx
    logp_ref[...] = logits - lse


def dialogue_gnn_forward(u2, wih, whh, bih, bhh, wq, bq, wk, bk,
                         nmask, rm0, rm1, w1c, w2c, wl, bl, wsp, bsp):
    TB = u2.shape[0]
    B, L, _ = nmask.shape
    Hg = whh.shape[-1]
    Cpad = wsp.shape[-1]
    vmem = pl.BlockSpec(memory_space=pltpu.MemorySpace.VMEM)
    return pl.pallas_call(
        fused_kernel,
        out_shape=(jax.ShapeDtypeStruct((B, L, L), jnp.float32),   # attention scores
                   jax.ShapeDtypeStruct((TB, 2 * Hg), jnp.float32),  # cat(x, out2)
                   jax.ShapeDtypeStruct((TB, Cpad), jnp.float32)),   # log-probs (padded)
        in_specs=[vmem] * 18,
        out_specs=(vmem, vmem, vmem),
        scratch_shapes=[pltpu.VMEM((B, L, Hg), jnp.float32)],
    )(u2, wih, whh, bih, bhh, wq, bq, wk, bk, nmask, rm0, rm1,
      w1c, w2c, wl, bl, wsp, bsp)


# --------------------------------------------------------------------------
# Host-side glue: data-dependent edge construction (identical to the PyTorch code)
# --------------------------------------------------------------------------
def edge_perms(l, speaker):
    perms = set()
    for i in range(1, l):
        s = []
        c = 0
        tau = i - 1
        while tau >= 0 and c < 1:
            if speaker[tau, 0] == speaker[i, 0] and speaker[tau, 0] not in s:
                perms.add((i, tau))
                c += 1
                s.append(speaker[tau, 0])
            elif speaker[tau, 0] not in s:
                perms.add((i, tau))
                s.append(speaker[tau, 0])
            tau -= 1
    return sorted(perms)


# --------------------------------------------------------------------------
if __name__ == "__main__":
    D_e = 32
    H = 2 * D_e            # graph hidden size
    n_classes = 6
    C_pad = 128            # lane-dense logits
    n_speakers = 2
    T = 8                  # max_seq_len
    B = 2
    seq_lengths = [8, 6]

    key = jax.random.PRNGKey(0)
    keys = jax.random.split(key, 20)

    # ---------------- inputs ----------------
    U = jax.random.normal(keys[0], (T, B, D_e), jnp.float32)
    speaker_ids = np.array(jax.random.randint(keys[1], (T, B), 0, n_speakers))
    qmask = np.zeros((T, B, n_speakers), np.float32)
    for t in range(T):
        for b in range(B):
            qmask[t, b, speaker_ids[t, b]] = 1.0
    umask = np.zeros((B, T), np.float32)
    for b in range(B):
        umask[b, :seq_lengths[b]] = 1.0

    # ---------------- deterministic parameters ----------------
    def uinit(k, shape, fan_in):
        bound = 1.0 / math.sqrt(fan_in)
        return jax.random.uniform(k, shape, jnp.float32, -bound, bound)

    # TransGRU stand-in weights, stored per-gate (r, z, n) and in bf16 for the MXU
    wih = uinit(keys[2], (3, D_e, H), D_e).astype(jnp.bfloat16)
    whh = uinit(keys[3], (3, H, H), H).astype(jnp.bfloat16)
    bih = uinit(keys[4], (3, 1, H), H)
    bhh = uinit(keys[5], (3, 1, H), H)

    # MaskedEdgeAttention w_q / w_k
    wq = uinit(keys[6], (H, H), H).astype(jnp.bfloat16)
    bq = uinit(keys[7], (1, H), H)
    wk = uinit(keys[8], (H, H), H).astype(jnp.bfloat16)
    bk = uinit(keys[9], (1, H), H)

    # GNN relation weights (num_relations = 2), fused along the contraction dim (K=2H)
    w1 = 0.1 * jax.random.normal(keys[10], (2, H, H), jnp.float32)
    w2 = 0.1 * jax.random.normal(keys[11], (2, H, H), jnp.float32)
    w1c = jnp.concatenate([w1[0], w1[1]], axis=0).astype(jnp.bfloat16)   # (2H, H)
    w2c = jnp.concatenate([w2[0], w2[1]], axis=0).astype(jnp.bfloat16)   # (2H, H)

    # classifier: linear (2H -> H), smax_fc (H -> n_classes) padded to 128 lanes
    wl = uinit(keys[12], (2 * H, H), 2 * H).astype(jnp.bfloat16)
    bl = uinit(keys[13], (1, H), 2 * H)
    ws = uinit(keys[14], (H, n_classes), H)
    bs = uinit(keys[15], (1, n_classes), H)
    wsp = jnp.zeros((H, C_pad), jnp.float32).at[:, :n_classes].set(ws).astype(jnp.bfloat16)
    bsp = jnp.full((1, C_pad), -1e30, jnp.float32).at[:, :n_classes].set(bs)

    # ---------------- edge construction (depends only on qmask / seq_lengths) ---------
    edge_ind = [edge_perms(seq_lengths[j], qmask[:seq_lengths[j], j, :]) for j in range(B)]

    nmask = np.zeros((B, T, T), np.float32)   # neighbour mask for the attention softmax
    deg = np.zeros((B, T), np.float32)        # edges per source utterance (mean aggr.)
    for j in range(B):
        for (i, tau) in edge_ind[j]:
            nmask[j, i, tau] = 1.0
            deg[j, i] += 1.0

    rm0 = np.zeros((B, T, T), np.float32)     # relation-weighted masks: 2/deg at edges
    rm1 = np.zeros((B, T, T), np.float32)
    edge_src, edge_dst = [], []
    edge_b, edge_i, edge_tau, edge_type_list = [], [], [], []
    edge_index_lengths = []
    length_sum = 0
    for j in range(B):
        perms = edge_ind[j]
        edge_index_lengths.append(len(perms))
        for (i, tau) in perms:
            s0 = 0 if qmask[i, j, 0] == 1 else 1
            s1 = 0 if qmask[tau, j, 0] == 1 else 1
            etype = 0 if s0 == s1 else 1
            (rm0 if etype == 0 else rm1)[j, i, tau] = 2.0 / deg[j, i]
            edge_src.append(i + length_sum)
            edge_dst.append(tau + length_sum)
            edge_b.append(j)
            edge_i.append(i)
            edge_tau.append(tau)
            edge_type_list.append(etype)
        length_sum += seq_lengths[j]

    # ---------------- single fused Pallas call ----------------
    U2 = U.reshape(T * B, D_e)                # row = t*B + b (time-major GRU input)
    scores, feat_slots, logp_slots = dialogue_gnn_forward(
        U2, wih, whh, bih, bhh, wq, bq, wk, bk,
        jnp.asarray(nmask), jnp.asarray(rm0), jnp.asarray(rm1),
        w1c, w2c, wl, bl, wsp, bsp)

    # ---------------- compact padded node slots -> model outputs ----------------
    valid = jnp.asarray(np.array(
        [b * T + t for b in range(B) for t in range(seq_lengths[b])], np.int32))
    feat_nodes = feat_slots[valid]                        # (N, 2H) = cat(x, out2)
    embd_1 = feat_nodes[:, :H]                            # x (graph-net input features)
    embd_2 = feat_nodes                                   # emotions = cat(x, out2)
    log_prob = logp_slots[valid][:, :n_classes]

    edge_index = jnp.stack([jnp.asarray(np.array(edge_src, np.int32)),
                            jnp.asarray(np.array(edge_dst, np.int32))], axis=0)
    edge_norm = scores[np.array(edge_b), np.array(edge_i), np.array(edge_tau)]
    edge_type = jnp.asarray(np.array(edge_type_list, np.int32))
    speaker = jnp.asarray(np.array(
        [0 if qmask[i, j, 0] == 1 else 1 for j in range(B) for i in range(seq_lengths[j])],
        np.int32))

    outputs = (embd_1, embd_2, log_prob, edge_index, edge_norm,
               edge_type, edge_index_lengths)
    jax.block_until_ready((embd_1, embd_2, log_prob, edge_index, edge_norm, speaker))
    print("KERNEL_OK")
</pallas_src>

<mosaic_0001>
module attributes {stable_mosaic.version = 11 : i64} {
  func.func @fused_kernel(%arg0: memref<16x32xf32, #tpu.memory_space<vmem>>, %arg1: memref<3x32x64xbf16, #tpu.memory_space<vmem>>, %arg2: memref<3x64x64xbf16, #tpu.memory_space<vmem>>, %arg3: memref<3x1x64xf32, #tpu.memory_space<vmem>>, %arg4: memref<3x1x64xf32, #tpu.memory_space<vmem>>, %arg5: memref<64x64xbf16, #tpu.memory_space<vmem>>, %arg6: memref<1x64xf32, #tpu.memory_space<vmem>>, %arg7: memref<64x64xbf16, #tpu.memory_space<vmem>>, %arg8: memref<1x64xf32, #tpu.memory_space<vmem>>, %arg9: memref<2x8x8xf32, #tpu.memory_space<vmem>>, %arg10: memref<2x8x8xf32, #tpu.memory_space<vmem>>, %arg11: memref<2x8x8xf32, #tpu.memory_space<vmem>>, %arg12: memref<128x64xbf16, #tpu.memory_space<vmem>>, %arg13: memref<128x64xbf16, #tpu.memory_space<vmem>>, %arg14: memref<128x64xbf16, #tpu.memory_space<vmem>>, %arg15: memref<1x64xf32, #tpu.memory_space<vmem>>, %arg16: memref<64x128xbf16, #tpu.memory_space<vmem>>, %arg17: memref<1x128xf32, #tpu.memory_space<vmem>>, %arg18: memref<2x8x8xf32, #tpu.memory_space<vmem>>, %arg19: memref<16x128xf32, #tpu.memory_space<vmem>>, %arg20: memref<16x128xf32, #tpu.memory_space<vmem>>, %arg21: memref<2x8x64xf32, #tpu.memory_space<vmem>>) attributes {dimension_semantics = [], scalar_prefetch = 0 : i64, scratch_operands = 1 : i64, tpu.core_type = #tpu.core_type<tc>} {
    %c0 = arith.constant 0 : index
    %c0_0 = arith.constant 0 : index
    %0 = vector.load %arg0[%c0, %c0_0] : memref<16x32xf32, #tpu.memory_space<vmem>>, vector<16x32xf32>
    %c0_1 = arith.constant 0 : index
    %c0_2 = arith.constant 0 : index
    %c0_3 = arith.constant 0 : index
    %1 = vector.load %arg1[%c0_1, %c0_2, %c0_3] : memref<3x32x64xbf16, #tpu.memory_space<vmem>>, vector<1x32x64xbf16>
    %2 = vector.shape_cast %1 : vector<1x32x64xbf16> to vector<32x64xbf16>
    %3 = arith.truncf %0 : vector<16x32xf32> to vector<16x32xbf16>
    %cst = arith.constant dense<0.000000e+00> : vector<16x64xf32>
    %4 = tpu.matmul %3, %2, %cst {dimension_numbers = #tpu.dot_dimension_numbers<[1], [0], [0], [1], [0, 0, 1, 1], [], []>} : vector<16x32xbf16>, vector<32x64xbf16>, vector<16x64xf32> -> vector<16x64xf32>
    %c0_4 = arith.constant 0 : index
    %c0_5 = arith.constant 0 : index
    %c0_6 = arith.constant 0 : index
    %5 = vector.load %arg3[%c0_4, %c0_5, %c0_6] : memref<3x1x64xf32, #tpu.memory_space<vmem>>, vector<1x1x64xf32>
    %6 = vector.shape_cast %5 : vector<1x1x64xf32> to vector<1x64xf32>
    %7 = vector.broadcast %6 : vector<1x64xf32> to vector<16x64xf32>
    %8 = arith.addf %4, %7 : vector<16x64xf32>
    %c1 = arith.constant 1 : index
    %c0_7 = arith.constant 0 : index
    %c0_8 = arith.constant 0 : index
    %9 = vector.load %arg1[%c1, %c0_7, %c0_8] : memref<3x32x64xbf16, #tpu.memory_space<vmem>>, vector<1x32x64xbf16>
    %10 = vector.shape_cast %9 : vector<1x32x64xbf16> to vector<32x64xbf16>
    %11 = arith.truncf %0 : vector<16x32xf32> to vector<16x32xbf16>
    %cst_9 = arith.constant dense<0.000000e+00> : vector<16x64xf32>
    %12 = tpu.matmul %11, %10, %cst_9 {dimension_numbers = #tpu.dot_dimension_numbers<[1], [0], [0], [1], [0, 0, 1, 1], [], []>} : vector<16x32xbf16>, vector<32x64xbf16>, vector<16x64xf32> -> vector<16x64xf32>
    %c1_10 = arith.constant 1 : index
    %c0_11 = arith.constant 0 : index
    %c0_12 = arith.constant 0 : index
    %13 = vector.load %arg3[%c1_10, %c0_11, %c0_12] : memref<3x1x64xf32, #tpu.memory_space<vmem>>, vector<1x1x64xf32>
    %14 = vector.shape_cast %13 : vector<1x1x64xf32> to vector<1x64xf32>
    %15 = vector.broadcast %14 : vector<1x64xf32> to vector<16x64xf32>
    %16 = arith.addf %12, %15 : vector<16x64xf32>
    %c2 = arith.constant 2 : index
    %c0_13 = arith.constant 0 : index
    %c0_14 = arith.constant 0 : index
    %17 = vector.load %arg1[%c2, %c0_13, %c0_14] : memref<3x32x64xbf16, #tpu.memory_space<vmem>>, vector<1x32x64xbf16>
    %18 = vector.shape_cast %17 : vector<1x32x64xbf16> to vector<32x64xbf16>
    %19 = arith.truncf %0 : vector<16x32xf32> to vector<16x32xbf16>
    %cst_15 = arith.constant dense<0.000000e+00> : vector<16x64xf32>
    %20 = tpu.matmul %19, %18, %cst_15 {dimension_numbers = #tpu.dot_dimension_numbers<[1], [0], [0], [1], [0, 0, 1, 1], [], []>} : vector<16x32xbf16>, vector<32x64xbf16>, vector<16x64xf32> -> vector<16x64xf32>
    %c2_16 = arith.constant 2 : index
    %c0_17 = arith.constant 0 : index
    %c0_18 = arith.constant 0 : index
    %21 = vector.load %arg3[%c2_16, %c0_17, %c0_18] : memref<3x1x64xf32, #tpu.memory_space<vmem>>, vector<1x1x64xf32>
    %22 = vector.shape_cast %21 : vector<1x1x64xf32> to vector<1x64xf32>
    %23 = vector.broadcast %22 : vector<1x64xf32> to vector<16x64xf32>
    %24 = arith.addf %20, %23 : vector<16x64xf32>
    %c0_19 = arith.constant 0 : index
    %c0_20 = arith.constant 0 : index
    %c0_21 = arith.constant 0 : index
    %25 = vector.load %arg2[%c0_19, %c0_20, %c0_21] : memref<3x64x64xbf16, #tpu.memory_space<vmem>>, vector<1x64x64xbf16>
    %26 = vector.shape_cast %25 : vector<1x64x64xbf16> to vector<64x64xbf16>
    %c1_22 = arith.constant 1 : index
    %c0_23 = arith.constant 0 : index
    %c0_24 = arith.constant 0 : index
    %27 = vector.load %arg2[%c1_22, %c0_23, %c0_24] : memref<3x64x64xbf16, #tpu.memory_space<vmem>>, vector<1x64x64xbf16>
    %28 = vector.shape_cast %27 : vector<1x64x64xbf16> to vector<64x64xbf16>
    %c2_25 = arith.constant 2 : index
    %c0_26 = arith.constant 0 : index
    %c0_27 = arith.constant 0 : index
    %29 = vector.load %arg2[%c2_25, %c0_26, %c0_27] : memref<3x64x64xbf16, #tpu.memory_space<vmem>>, vector<1x64x64xbf16>
    %30 = vector.shape_cast %29 : vector<1x64x64xbf16> to vector<64x64xbf16>
    %c0_28 = arith.constant 0 : index
    %c0_29 = arith.constant 0 : index
    %c0_30 = arith.constant 0 : index
    %31 = vector.load %arg4[%c0_28, %c0_29, %c0_30] : memref<3x1x64xf32, #tpu.memory_space<vmem>>, vector<1x1x64xf32>
    %32 = vector.shape_cast %31 : vector<1x1x64xf32> to vector<1x64xf32>
    %c1_31 = arith.constant 1 : index
    %c0_32 = arith.constant 0 : index
    %c0_33 = arith.constant 0 : index
    %33 = vector.load %arg4[%c1_31, %c0_32, %c0_33] : memref<3x1x64xf32, #tpu.memory_space<vmem>>, vector<1x1x64xf32>
    %34 = vector.shape_cast %33 : vector<1x1x64xf32> to vector<1x64xf32>
    %c2_34 = arith.constant 2 : index
    %c0_35 = arith.constant 0 : index
    %c0_36 = arith.constant 0 : index
    %35 = vector.load %arg4[%c2_34, %c0_35, %c0_36] : memref<3x1x64xf32, #tpu.memory_space<vmem>>, vector<1x1x64xf32>
    %36 = vector.shape_cast %35 : vector<1x1x64xf32> to vector<1x64xf32>
    %cst_37 = arith.constant 0.000000e+00 : f32
    %37 = vector.broadcast %cst_37 : f32 to vector<2x64xf32>
    %38 = arith.truncf %37 : vector<2x64xf32> to vector<2x64xbf16>
    %cst_38 = arith.constant dense<0.000000e+00> : vector<2x64xf32>
    %39 = tpu.matmul %38, %26, %cst_38 {dimension_numbers = #tpu.dot_dimension_numbers<[1], [0], [0], [1], [0, 0, 1, 1], [], []>} : vector<2x64xbf16>, vector<64x64xbf16>, vector<2x64xf32> -> vector<2x64xf32>
    %40 = vector.broadcast %32 : vector<1x64xf32> to vector<2x64xf32>
    %41 = arith.addf %39, %40 : vector<2x64xf32>
    %42 = arith.truncf %37 : vector<2x64xf32> to vector<2x64xbf16>
    %cst_39 = arith.constant dense<0.000000e+00> : vector<2x64xf32>
    %43 = tpu.matmul %42, %28, %cst_39 {dimension_numbers = #tpu.dot_dimension_numbers<[1], [0], [0], [1], [0, 0, 1, 1], [], []>} : vector<2x64xbf16>, vector<64x64xbf16>, vector<2x64xf32> -> vector<2x64xf32>
    %44 = vector.broadcast %34 : vector<1x64xf32> to vector<2x64xf32>
    %45 = arith.addf %43, %44 : vector<2x64xf32>
    %46 = arith.truncf %37 : vector<2x64xf32> to vector<2x64xbf16>
    %cst_40 = arith.constant dense<0.000000e+00> : vector<2x64xf32>
    %47 = tpu.matmul %46, %30, %cst_40 {dimension_numbers = #tpu.dot_dimension_numbers<[1], [0], [0], [1], [0, 0, 1, 1], [], []>} : vector<2x64xbf16>, vector<64x64xbf16>, vector<2x64xf32> -> vector<2x64xf32>
    %48 = vector.broadcast %36 : vector<1x64xf32> to vector<2x64xf32>
    %49 = arith.addf %47, %48 : vector<2x64xf32>
    %50 = vector.extract_strided_slice %8 {offsets = [0, 0], sizes = [2, 64], strides = [1, 1]} : vector<16x64xf32> to vector<2x64xf32>
    %51 = arith.addf %50, %41 : vector<2x64xf32>
    %52 = arith.negf %51 : vector<2x64xf32>
    %53 = math.exp %52 : vector<2x64xf32>
    %cst_41 = arith.constant 1.000000e+00 : f32
    %54 = vector.broadcast %cst_41 : f32 to vector<2x64xf32>
    %55 = arith.addf %54, %53 : vector<2x64xf32>
    %56 = arith.divf %54, %55 : vector<2x64xf32>
    %57 = vector.extract_strided_slice %16 {offsets = [0, 0], sizes = [2, 64], strides = [1, 1]} : vector<16x64xf32> to vector<2x64xf32>
    %58 = arith.addf %57, %45 : vector<2x64xf32>
    %59 = arith.negf %58 : vector<2x64xf32>
    %60 = math.exp %59 : vector<2x64xf32>
    %cst_42 = arith.constant 1.000000e+00 : f32
    %61 = vector.broadcast %cst_42 : f32 to vector<2x64xf32>
    %62 = arith.addf %61, %60 : vector<2x64xf32>
    %63 = arith.divf %61, %62 : vector<2x64xf32>
    %64 = vector.extract_strided_slice %24 {offsets = [0, 0], sizes = [2, 64], strides = [1, 1]} : vector<16x64xf32> to vector<2x64xf32>
    %65 = arith.mulf %56, %49 : vector<2x64xf32>
    %66 = arith.addf %64, %65 : vector<2x64xf32>
    %67 = math.tanh %66 : vector<2x64xf32>
    %cst_43 = arith.constant 1.000000e+00 : f32
    %68 = vector.broadcast %cst_43 : f32 to vector<2x64xf32>
    %69 = arith.subf %68, %63 : vector<2x64xf32>
    %70 = arith.mulf %69, %67 : vector<2x64xf32>
    %71 = arith.mulf %63, %37 : vector<2x64xf32>
    %72 = arith.addf %70, %71 : vector<2x64xf32>
    %73 = vector.shape_cast %72 : vector<2x64xf32> to vector<2x1x64xf32>
    %c0_44 = arith.constant 0 : index
    %c0_45 = arith.constant 0 : index
    %c0_46 = arith.constant 0 : index
    %74 = vector.load %arg21[%c0_44, %c0_45, %c0_46] : memref<2x8x64xf32, #tpu.memory_space<vmem>>, vector<2x1x64xf32>
    tpu.vector_store %arg21[%c0_44, %c0_45, %c0_46], %73 {strides = array<i32>} : memref<2x8x64xf32, #tpu.memory_space<vmem>>, vector<2x1x64xf32>,
    %75 = arith.truncf %72 : vector<2x64xf32> to vector<2x64xbf16>
    %cst_47 = arith.constant dense<0.000000e+00> : vector<2x64xf32>
    %76 = tpu.matmul %75, %26, %cst_47 {dimension_numbers = #tpu.dot_dimension_numbers<[1], [0], [0], [1], [0, 0, 1, 1], [], []>} : vector<2x64xbf16>, vector<64x64xbf16>, vector<2x64xf32> -> vector<2x64xf32>
    %77 = vector.broadcast %32 : vector<1x64xf32> to vector<2x64xf32>
    %78 = arith.addf %76, %77 : vector<2x64xf32>
    %79 = arith.truncf %72 : vector<2x64xf32> to vector<2x64xbf16>
    %cst_48 = arith.constant dense<0.000000e+00> : vector<2x64xf32>
    %80 = tpu.matmul %79, %28, %cst_48 {dimension_numbers = #tpu.dot_dimension_numbers<[1], [0], [0], [1], [0, 0, 1, 1], [], []>} : vector<2x64xbf16>, vector<64x64xbf16>, vector<2x64xf32> -> vector<2x64xf32>
    %81 = vector.broadcast %34 : vector<1x64xf32> to vector<2x64xf32>
    %82 = arith.addf %80, %81 : vector<2x64xf32>
    %83 = arith.truncf %72 : vector<2x64xf32> to vector<2x64xbf16>
    %cst_49 = arith.constant dense<0.000000e+00> : vector<2x64xf32>
    %84 = tpu.matmul %83, %30, %cst_49 {dimension_numbers = #tpu.dot_dimension_numbers<[1], [0], [0], [1], [0, 0, 1, 1], [], []>} : vector<2x64xbf16>, vector<64x64xbf16>, vector<2x64xf32> -> vector<2x64xf32>
    %85 = vector.broadcast %36 : vector<1x64xf32> to vector<2x64xf32>
    %86 = arith.addf %84, %85 : vector<2x64xf32>
    %87 = vector.extract_strided_slice %8 {offsets = [2, 0], sizes = [2, 64], strides = [1, 1]} : vector<16x64xf32> to vector<2x64xf32>
    %88 = arith.addf %87, %78 : vector<2x64xf32>
    %89 = arith.negf %88 : vector<2x64xf32>
    %90 = math.exp %89 : vector<2x64xf32>
    %cst_50 = arith.constant 1.000000e+00 : f32
    %91 = vector.broadcast %cst_50 : f32 to vector<2x64xf32>
    %92 = arith.addf %91, %90 : vector<2x64xf32>
    %93 = arith.divf %91, %92 : vector<2x64xf32>
    %94 = vector.extract_strided_slice %16 {offsets = [2, 0], sizes = [2, 64], strides = [1, 1]} : vector<16x64xf32> to vector<2x64xf32>
    %95 = arith.addf %94, %82 : vector<2x64xf32>
    %96 = arith.negf %95 : vector<2x64xf32>
    %97 = math.exp %96 : vector<2x64xf32>
    %cst_51 = arith.constant 1.000000e+00 : f32
    %98 = vector.broadcast %cst_51 : f32 to vector<2x64xf32>
    %99 = arith.addf %98, %97 : vector<2x64xf32>
    %100 = arith.divf %98, %99 : vector<2x64xf32>
    %101 = vector.extract_strided_slice %24 {offsets = [2, 0], sizes = [2, 64], strides = [1, 1]} : vector<16x64xf32> to vector<2x64xf32>
    %102 = arith.mulf %93, %86 : vector<2x64xf32>
    %103 = arith.addf %101, %102 : vector<2x64xf32>
    %104 = math.tanh %103 : vector<2x64xf32>
    %cst_52 = arith.constant 1.000000e+00 : f32
    %105 = vector.broadcast %cst_52 : f32 to vector<2x64xf32>
    %106 = arith.subf %105, %100 : vector<2x64xf32>
    %107 = arith.mulf %106, %104 : vector<2x64xf32>
    %108 = arith.mulf %100, %72 : vector<2x64xf32>
    %109 = arith.addf %107, %108 : vector<2x64xf32>
    %110 = vector.shape_cast %109 : vector<2x64xf32> to vector<2x1x64xf32>
    %c0_53 = arith.constant 0 : index
    %c1_54 = arith.constant 1 : index
    %c0_55 = arith.constant 0 : index
    %111 = vector.load %arg21[%c0_53, %c1_54, %c0_55] : memref<2x8x64xf32, #tpu.memory_space<vmem>>, vector<2x1x64xf32>
    tpu.vector_store %arg21[%c0_53, %c1_54, %c0_55], %110 {strides = array<i32>} : memref<2x8x64xf32, #tpu.memory_space<vmem>>, vector<2x1x64xf32>,
    %112 = arith.truncf %109 : vector<2x64xf32> to vector<2x64xbf16>
    %cst_56 = arith.constant dense<0.000000e+00> : vector<2x64xf32>
    %113 = tpu.matmul %112, %26, %cst_56 {dimension_numbers = #tpu.dot_dimension_numbers<[1], [0], [0], [1], [0, 0, 1, 1], [], []>} : vector<2x64xbf16>, vector<64x64xbf16>, vector<2x64xf32> -> vector<2x64xf32>
    %114 = vector.broadcast %32 : vector<1x64xf32> to vector<2x64xf32>
    %115 = arith.addf %113, %114 : vector<2x64xf32>
    %116 = arith.truncf %109 : vector<2x64xf32> to vector<2x64xbf16>
    %cst_57 = arith.constant dense<0.000000e+00> : vector<2x64xf32>
    %117 = tpu.matmul %116, %28, %cst_57 {dimension_numbers = #tpu.dot_dimension_numbers<[1], [0], [0], [1], [0, 0, 1, 1], [], []>} : vector<2x64xbf16>, vector<64x64xbf16>, vector<2x64xf32> -> vector<2x64xf32>
    %118 = vector.broadcast %34 : vector<1x64xf32> to vector<2x64xf32>
    %119 = arith.addf %117, %118 : vector<2x64xf32>
    %120 = arith.truncf %109 : vector<2x64xf32> to vector<2x64xbf16>
    %cst_58 = arith.constant dense<0.000000e+00> : vector<2x64xf32>
    %121 = tpu.matmul %120, %30, %cst_58 {dimension_numbers = #tpu.dot_dimension_numbers<[1], [0], [0], [1], [0, 0, 1, 1], [], []>} : vector<2x64xbf16>, vector<64x64xbf16>, vector<2x64xf32> -> vector<2x64xf32>
    %122 = vector.broadcast %36 : vector<1x64xf32> to vector<2x64xf32>
    %123 = arith.addf %121, %122 : vector<2x64xf32>
    %124 = vector.extract_strided_slice %8 {offsets = [4, 0], sizes = [2, 64], strides = [1, 1]} : vector<16x64xf32> to vector<2x64xf32>
    %125 = arith.addf %124, %115 : vector<2x64xf32>
    %126 = arith.negf %125 : vector<2x64xf32>
    %127 = math.exp %126 : vector<2x64xf32>
    %cst_59 = arith.constant 1.000000e+00 : f32
    %128 = vector.broadcast %cst_59 : f32 to vector<2x64xf32>
    %129 = arith.addf %128, %127 : vector<2x64xf32>
    %130 = arith.divf %128, %129 : vector<2x64xf32>
    %131 = vector.extract_strided_slice %16 {offsets = [4, 0], sizes = [2, 64], strides = [1, 1]} : vector<16x64xf32> to vector<2x64xf32>
    %132 = arith.addf %131, %119 : vector<2x64xf32>
    %133 = arith.negf %132 : vector<2x64xf32>
    %134 = math.exp %133 : vector<2x64xf32>
    %cst_60 = arith.constant 1.000000e+00 : f32
    %135 = vector.broadcast %cst_60 : f32 to vector<2x64xf32>
    %136 = arith.addf %135, %134 : vector<2x64xf32>
    %137 = arith.divf %135, %136 : vector<2x64xf32>
    %138 = vector.extract_strided_slice %24 {offsets = [4, 0], sizes = [2, 64], strides = [1, 1]} : vector<16x64xf32> to vector<2x64xf32>
    %139 = arith.mulf %130, %123 : vector<2x64xf32>
    %140 = arith.addf %138, %139 : vector<2x64xf32>
    %141 = math.tanh %140 : vector<2x64xf32>
    %cst_61 = arith.constant 1.000000e+00 : f32
    %142 = vector.broadcast %cst_61 : f32 to vector<2x64xf32>
    %143 = arith.subf %142, %137 : vector<2x64xf32>
    %144 = arith.mulf %143, %141 : vector<2x64xf32>
    %145 = arith.mulf %137, %109 : vector<2x64xf32>
    %146 = arith.addf %144, %145 : vector<2x64xf32>
    %147 = vector.shape_cast %146 : vector<2x64xf32> to vector<2x1x64xf32>
    %c0_62 = arith.constant 0 : index
    %c2_63 = arith.constant 2 : index
    %c0_64 = arith.constant 0 : index
    %148 = vector.load %arg21[%c0_62, %c2_63, %c0_64] : memref<2x8x64xf32, #tpu.memory_space<vmem>>, vector<2x1x64xf32>
    tpu.vector_store %arg21[%c0_62, %c2_63, %c0_64], %147 {strides = array<i32>} : memref<2x8x64xf32, #tpu.memory_space<vmem>>, vector<2x1x64xf32>,
    %149 = arith.truncf %146 : vector<2x64xf32> to vector<2x64xbf16>
    %cst_65 = arith.constant dense<0.000000e+00> : vector<2x64xf32>
    %150 = tpu.matmul %149, %26, %cst_65 {dimension_numbers = #tpu.dot_dimension_numbers<[1], [0], [0], [1], [0, 0, 1, 1], [], []>} : vector<2x64xbf16>, vector<64x64xbf16>, vector<2x64xf32> -> vector<2x64xf32>
    %151 = vector.broadcast %32 : vector<1x64xf32> to vector<2x64xf32>
    %152 = arith.addf %150, %151 : vector<2x64xf32>
    %153 = arith.truncf %146 : vector<2x64xf32> to vector<2x64xbf16>
    %cst_66 = arith.constant dense<0.000000e+00> : vector<2x64xf32>
    %154 = tpu.matmul %153, %28, %cst_66 {dimension_numbers = #tpu.dot_dimension_numbers<[1], [0], [0], [1], [0, 0, 1, 1], [], []>} : vector<2x64xbf16>, vector<64x64xbf16>, vector<2x64xf32> -> vector<2x64xf32>
    %155 = vector.broadcast %34 : vector<1x64xf32> to vector<2x64xf32>
    %156 = arith.addf %154, %155 : vector<2x64xf32>
    %157 = arith.truncf %146 : vector<2x64xf32> to vector<2x64xbf16>
    %cst_67 = arith.constant dense<0.000000e+00> : vector<2x64xf32>
    %158 = tpu.matmul %157, %30, %cst_67 {dimension_numbers = #tpu.dot_dimension_numbers<[1], [0], [0], [1], [0, 0, 1, 1], [], []>} : vector<2x64xbf16>, vector<64x64xbf16>, vector<2x64xf32> -> vector<2x64xf32>
    %159 = vector.broadcast %36 : vector<1x64xf32> to vector<2x64xf32>
    %160 = arith.addf %158, %159 : vector<2x64xf32>
    %161 = vector.extract_strided_slice %8 {offsets = [6, 0], sizes = [2, 64], strides = [1, 1]} : vector<16x64xf32> to vector<2x64xf32>
    %162 = arith.addf %161, %152 : vector<2x64xf32>
    %163 = arith.negf %162 : vector<2x64xf32>
    %164 = math.exp %163 : vector<2x64xf32>
    %cst_68 = arith.constant 1.000000e+00 : f32
    %165 = vector.broadcast %cst_68 : f32 to vector<2x64xf32>
    %166 = arith.addf %165, %164 : vector<2x64xf32>
    %167 = arith.divf %165, %166 : vector<2x64xf32>
    %168 = vector.extract_strided_slice %16 {offsets = [6, 0], sizes = [2, 64], strides = [1, 1]} : vector<16x64xf32> to vector<2x64xf32>
    %169 = arith.addf %168, %156 : vector<2x64xf32>
    %170 = arith.negf %169 : vector<2x64xf32>
    %171 = math.exp %170 : vector<2x64xf32>
    %cst_69 = arith.constant 1.000000e+00 : f32
    %172 = vector.broadcast %cst_69 : f32 to vector<2x64xf32>
    %173 = arith.addf %172, %171 : vector<2x64xf32>
    %174 = arith.divf %172, %173 : vector<2x64xf32>
    %175 = vector.extract_strided_slice %24 {offsets = [6, 0], sizes = [2, 64], strides = [1, 1]} : vector<16x64xf32> to vector<2x64xf32>
    %176 = arith.mulf %167, %160 : vector<2x64xf32>
    %177 = arith.addf %175, %176 : vector<2x64xf32>
    %178 = math.tanh %177 : vector<2x64xf32>
    %cst_70 = arith.constant 1.000000e+00 : f32
    %179 = vector.broadcast %cst_70 : f32 to vector<2x64xf32>
    %180 = arith.subf %179, %174 : vector<2x64xf32>
    %181 = arith.mulf %180, %178 : vector<2x64xf32>
    %182 = arith.mulf %174, %146 : vector<2x64xf32>
    %183 = arith.addf %181, %182 : vector<2x64xf32>
    %184 = vector.shape_cast %183 : vector<2x64xf32> to vector<2x1x64xf32>
    %c0_71 = arith.constant 0 : index
    %c3 = arith.constant 3 : index
    %c0_72 = arith.constant 0 : index
    %185 = vector.load %arg21[%c0_71, %c3, %c0_72] : memref<2x8x64xf32, #tpu.memory_space<vmem>>, vector<2x1x64xf32>
    tpu.vector_store %arg21[%c0_71, %c3, %c0_72], %184 {strides = array<i32>} : memref<2x8x64xf32, #tpu.memory_space<vmem>>, vector<2x1x64xf32>,
    %186 = arith.truncf %183 : vector<2x64xf32> to vector<2x64xbf16>
    %cst_73 = arith.constant dense<0.000000e+00> : vector<2x64xf32>
    %187 = tpu.matmul %186, %26, %cst_73 {dimension_numbers = #tpu.dot_dimension_numbers<[1], [0], [0], [1], [0, 0, 1, 1], [], []>} : vector<2x64xbf16>, vector<64x64xbf16>, vector<2x64xf32> -> vector<2x64xf32>
    %188 = vector.broadcast %32 : vector<1x64xf32> to vector<2x64xf32>
    %189 = arith.addf %187, %188 : vector<2x64xf32>
    %190 = arith.truncf %183 : vector<2x64xf32> to vector<2x64xbf16>
    %cst_74 = arith.constant dense<0.000000e+00> : vector<2x64xf32>
    %191 = tpu.matmul %190, %28, %cst_74 {dimension_numbers = #tpu.dot_dimension_numbers<[1], [0], [0], [1], [0, 0, 1, 1], [], []>} : vector<2x64xbf16>, vector<64x64xbf16>, vector<2x64xf32> -> vector<2x64xf32>
    %192 = vector.broadcast %34 : vector<1x64xf32> to vector<2x64xf32>
    %193 = arith.addf %191, %192 : vector<2x64xf32>
    %194 = arith.truncf %183 : vector<2x64xf32> to vector<2x64xbf16>
    %cst_75 = arith.constant dense<0.000000e+00> : vector<2x64xf32>
    %195 = tpu.matmul %194, %30, %cst_75 {dimension_numbers = #tpu.dot_dimension_numbers<[1], [0], [0], [1], [0, 0, 1, 1], [], []>} : vector<2x64xbf16>, vector<64x64xbf16>, vector<2x64xf32> -> vector<2x64xf32>
    %196 = vector.broadcast %36 : vector<1x64xf32> to vector<2x64xf32>
    %197 = arith.addf %195, %196 : vector<2x64xf32>
    %198 = vector.extract_strided_slice %8 {offsets = [8, 0], sizes = [2, 64], strides = [1, 1]} : vector<16x64xf32> to vector<2x64xf32>
    %199 = arith.addf %198, %189 : vector<2x64xf32>
    %200 = arith.negf %199 : vector<2x64xf32>
    %201 = math.exp %200 : vector<2x64xf32>
    %cst_76 = arith.constant 1.000000e+00 : f32
    %202 = vector.broadcast %cst_76 : f32 to vector<2x64xf32>
    %203 = arith.addf %202, %201 : vector<2x64xf32>
    %204 = arith.divf %202, %203 : vector<2x64xf32>
    %205 = vector.extract_strided_slice %16 {offsets = [8, 0], sizes = [2, 64], strides = [1, 1]} : vector<16x64xf32> to vector<2x64xf32>
    %206 = arith.addf %205, %193 : vector<2x64xf32>
    %207 = arith.negf %206 : vector<2x64xf32>
    %208 = math.exp %207 : vector<2x64xf32>
    %cst_77 = arith.constant 1.000000e+00 : f32
    %209 = vector.broadcast %cst_77 : f32 to vector<2x64xf32>
    %210 = arith.addf %209, %208 : vector<2x64xf32>
    %211 = arith.divf %209, %210 : vector<2x64xf32>
    %212 = vector.extract_strided_slice %24 {offsets = [8, 0], sizes = [2, 64], strides = [1, 1]} : vector<16x64xf32> to vector<2x64xf32>
    %213 = arith.mulf %204, %197 : vector<2x64xf32>
    %214 = arith.addf %212, %213 : vector<2x64xf32>
    %215 = math.tanh %214 : vector<2x64xf32>
    %cst_78 = arith.constant 1.000000e+00 : f32
    %216 = vector.broadcast %cst_78 : f32 to vector<2x64xf32>
    %217 = arith.subf %216, %211 : vector<2x64xf32>
    %218 = arith.mulf %217, %215 : vector<2x64xf32>
    %219 = arith.mulf %211, %183 : vector<2x64xf32>
    %220 = arith.addf %218, %219 : vector<2x64xf32>
    %221 = vector.shape_cast %220 : vector<2x64xf32> to vector<2x1x64xf32>
    %c0_79 = arith.constant 0 : index
    %c4 = arith.constant 4 : index
    %c0_80 = arith.constant 0 : index
    %222 = vector.load %arg21[%c0_79, %c4, %c0_80] : memref<2x8x64xf32, #tpu.memory_space<vmem>>, vector<2x1x64xf32>
    tpu.vector_store %arg21[%c0_79, %c4, %c0_80], %221 {strides = array<i32>} : memref<2x8x64xf32, #tpu.memory_space<vmem>>, vector<2x1x64xf32>,
    %223 = arith.truncf %220 : vector<2x64xf32> to vector<2x64xbf16>
    %cst_81 = arith.constant dense<0.000000e+00> : vector<2x64xf32>
    %224 = tpu.matmul %223, %26, %cst_81 {dimension_numbers = #tpu.dot_dimension_numbers<[1], [0], [0], [1], [0, 0, 1, 1], [], []>} : vector<2x64xbf16>, vector<64x64xbf16>, vector<2x64xf32> -> vector<2x64xf32>
    %225 = vector.broadcast %32 : vector<1x64xf32> to vector<2x64xf32>
    %226 = arith.addf %224, %225 : vector<2x64xf32>
    %227 = arith.truncf %220 : vector<2x64xf32> to vector<2x64xbf16>
    %cst_82 = arith.constant dense<0.000000e+00> : vector<2x64xf32>
    %228 = tpu.matmul %227, %28, %cst_82 {dimension_numbers = #tpu.dot_dimension_numbers<[1], [0], [0], [1], [0, 0, 1, 1], [], []>} : vector<2x64xbf16>, vector<64x64xbf16>, vector<2x64xf32> -> vector<2x64xf32>
    %229 = vector.broadcast %34 : vector<1x64xf32> to vector<2x64xf32>
    %230 = arith.addf %228, %229 : vector<2x64xf32>
    %231 = arith.truncf %220 : vector<2x64xf32> to vector<2x64xbf16>
    %cst_83 = arith.constant dense<0.000000e+00> : vector<2x64xf32>
    %232 = tpu.matmul %231, %30, %cst_83 {dimension_numbers = #tpu.dot_dimension_numbers<[1], [0], [0], [1], [0, 0, 1, 1], [], []>} : vector<2x64xbf16>, vector<64x64xbf16>, vector<2x64xf32> -> vector<2x64xf32>
    %233 = vector.broadcast %36 : vector<1x64xf32> to vector<2x64xf32>
    %234 = arith.addf %232, %233 : vector<2x64xf32>
    %235 = vector.extract_strided_slice %8 {offsets = [10, 0], sizes = [2, 64], strides = [1, 1]} : vector<16x64xf32> to vector<2x64xf32>
    %236 = arith.addf %235, %226 : vector<2x64xf32>
    %237 = arith.negf %236 : vector<2x64xf32>
    %238 = math.exp %237 : vector<2x64xf32>
    %cst_84 = arith.constant 1.000000e+00 : f32
    %239 = vector.broadcast %cst_84 : f32 to vector<2x64xf32>
    %240 = arith.addf %239, %238 : vector<2x64xf32>
    %241 = arith.divf %239, %240 : vector<2x64xf32>
    %242 = vector.extract_strided_slice %16 {offsets = [10, 0], sizes = [2, 64], strides = [1, 1]} : vector<16x64xf32> to vector<2x64xf32>
    %243 = arith.addf %242, %230 : vector<2x64xf32>
    %244 = arith.negf %243 : vector<2x64xf32>
    %245 = math.exp %244 : vector<2x64xf32>
    %cst_85 = arith.constant 1.000000e+00 : f32
    %246 = vector.broadcast %cst_85 : f32 to vector<2x64xf32>
    %247 = arith.addf %246, %245 : vector<2x64xf32>
    %248 = arith.divf %246, %247 : vector<2x64xf32>
    %249 = vector.extract_strided_slice %24 {offsets = [10, 0], sizes = [2, 64], strides = [1, 1]} : vector<16x64xf32> to vector<2x64xf32>
    %250 = arith.mulf %241, %234 : vector<2x64xf32>
    %251 = arith.addf %249, %250 : vector<2x64xf32>
    %252 = math.tanh %251 : vector<2x64xf32>
    %cst_86 = arith.constant 1.000000e+00 : f32
    %253 = vector.broadcast %cst_86 : f32 to vector<2x64xf32>
    %254 = arith.subf %253, %248 : vector<2x64xf32>
    %255 = arith.mulf %254, %252 : vector<2x64xf32>
    %256 = arith.mulf %248, %220 : vector<2x64xf32>
    %257 = arith.addf %255, %256 : vector<2x64xf32>
    %258 = vector.shape_cast %257 : vector<2x64xf32> to vector<2x1x64xf32>
    %c0_87 = arith.constant 0 : index
    %c5 = arith.constant 5 : index
    %c0_88 = arith.constant 0 : index
    %259 = vector.load %arg21[%c0_87, %c5, %c0_88] : memref<2x8x64xf32, #tpu.memory_space<vmem>>, vector<2x1x64xf32>
    tpu.vector_store %arg21[%c0_87, %c5, %c0_88], %258 {strides = array<i32>} : memref<2x8x64xf32, #tpu.memory_space<vmem>>, vector<2x1x64xf32>,
    %260 = arith.truncf %257 : vector<2x64xf32> to vector<2x64xbf16>
    %cst_89 = arith.constant dense<0.000000e+00> : vector<2x64xf32>
    %261 = tpu.matmul %260, %26, %cst_89 {dimension_numbers = #tpu.dot_dimension_numbers<[1], [0], [0], [1], [0, 0, 1, 1], [], []>} : vector<2x64xbf16>, vector<64x64xbf16>, vector<2x64xf32> -> vector<2x64xf32>
    %262 = vector.broadcast %32 : vector<1x64xf32> to vector<2x64xf32>
    %263 = arith.addf %261, %262 : vector<2x64xf32>
    %264 = arith.truncf %257 : vector<2x64xf32> to vector<2x64xbf16>
    %cst_90 = arith.constant dense<0.000000e+00> : vector<2x64xf32>
    %265 = tpu.matmul %264, %28, %cst_90 {dimension_numbers = #tpu.dot_dimension_numbers<[1], [0], [0], [1], [0, 0, 1, 1], [], []>} : vector<2x64xbf16>, vector<64x64xbf16>, vector<2x64xf32> -> vector<2x64xf32>
    %266 = vector.broadcast %34 : vector<1x64xf32> to vector<2x64xf32>
    %267 = arith.addf %265, %266 : vector<2x64xf32>
    %268 = arith.truncf %257 : vector<2x64xf32> to vector<2x64xbf16>
    %cst_91 = arith.constant dense<0.000000e+00> : vector<2x64xf32>
    %269 = tpu.matmul %268, %30, %cst_91 {dimension_numbers = #tpu.dot_dimension_numbers<[1], [0], [0], [1], [0, 0, 1, 1], [], []>} : vector<2x64xbf16>, vector<64x64xbf16>, vector<2x64xf32> -> vector<2x64xf32>
    %270 = vector.broadcast %36 : vector<1x64xf32> to vector<2x64xf32>
    %271 = arith.addf %269, %270 : vector<2x64xf32>
    %272 = vector.extract_strided_slice %8 {offsets = [12, 0], sizes = [2, 64], strides = [1, 1]} : vector<16x64xf32> to vector<2x64xf32>
    %273 = arith.addf %272, %263 : vector<2x64xf32>
    %274 = arith.negf %273 : vector<2x64xf32>
    %275 = math.exp %274 : vector<2x64xf32>
    %cst_92 = arith.constant 1.000000e+00 : f32
    %276 = vector.broadcast %cst_92 : f32 to vector<2x64xf32>
    %277 = arith.addf %276, %275 : vector<2x64xf32>
    %278 = arith.divf %276, %277 : vector<2x64xf32>
    %279 = vector.extract_strided_slice %16 {offsets = [12, 0], sizes = [2, 64], strides = [1, 1]} : vector<16x64xf32> to vector<2x64xf32>
    %280 = arith.addf %279, %267 : vector<2x64xf32>
    %281 = arith.negf %280 : vector<2x64xf32>
    %282 = math.exp %281 : vector<2x64xf32>
    %cst_93 = arith.constant 1.000000e+00 : f32
    %283 = vector.broadcast %cst_93 : f32 to vector<2x64xf32>
    %284 = arith.addf %283, %282 : vector<2x64xf32>
    %285 = arith.divf %283, %284 : vector<2x64xf32>
    %286 = vector.extract_strided_slice %24 {offsets = [12, 0], sizes = [2, 64], strides = [1, 1]} : vector<16x64xf32> to vector<2x64xf32>
    %287 = arith.mulf %278, %271 : vector<2x64xf32>
    %288 = arith.addf %286, %287 : vector<2x64xf32>
    %289 = math.tanh %288 : vector<2x64xf32>
    %cst_94 = arith.constant 1.000000e+00 : f32
    %290 = vector.broadcast %cst_94 : f32 to vector<2x64xf32>
    %291 = arith.subf %290, %285 : vector<2x64xf32>
    %292 = arith.mulf %291, %289 : vector<2x64xf32>
    %293 = arith.mulf %285, %257 : vector<2x64xf32>
    %294 = arith.addf %292, %293 : vector<2x64xf32>
    %295 = vector.shape_cast %294 : vector<2x64xf32> to vector<2x1x64xf32>
    %c0_95 = arith.constant 0 : index
    %c6 = arith.constant 6 : index
    %c0_96 = arith.constant 0 : index
    %296 = vector.load %arg21[%c0_95, %c6, %c0_96] : memref<2x8x64xf32, #tpu.memory_space<vmem>>, vector<2x1x64xf32>
    tpu.vector_store %arg21[%c0_95, %c6, %c0_96], %295 {strides = array<i32>} : memref<2x8x64xf32, #tpu.memory_space<vmem>>, vector<2x1x64xf32>,
    %297 = arith.truncf %294 : vector<2x64xf32> to vector<2x64xbf16>
    %cst_97 = arith.constant dense<0.000000e+00> : vector<2x64xf32>
    %298 = tpu.matmul %297, %26, %cst_97 {dimension_numbers = #tpu.dot_dimension_numbers<[1], [0], [0], [1], [0, 0, 1, 1], [], []>} : vector<2x64xbf16>, vector<64x64xbf16>, vector<2x64xf32> -> vector<2x64xf32>
    %299 = vector.broadcast %32 : vector<1x64xf32> to vector<2x64xf32>
    %300 = arith.addf %298, %299 : vector<2x64xf32>
    %301 = arith.truncf %294 : vector<2x64xf32> to vector<2x64xbf16>
    %cst_98 = arith.constant dense<0.000000e+00> : vector<2x64xf32>
    %302 = tpu.matmul %301, %28, %cst_98 {dimension_numbers = #tpu.dot_dimension_numbers<[1], [0], [0], [1], [0, 0, 1, 1], [], []>} : vector<2x64xbf16>, vector<64x64xbf16>, vector<2x64xf32> -> vector<2x64xf32>
    %303 = vector.broadcast %34 : vector<1x64xf32> to vector<2x64xf32>
    %304 = arith.addf %302, %303 : vector<2x64xf32>
    %305 = arith.truncf %294 : vector<2x64xf32> to vector<2x64xbf16>
    %cst_99 = arith.constant dense<0.000000e+00> : vector<2x64xf32>
    %306 = tpu.matmul %305, %30, %cst_99 {dimension_numbers = #tpu.dot_dimension_numbers<[1], [0], [0], [1], [0, 0, 1, 1], [], []>} : vector<2x64xbf16>, vector<64x64xbf16>, vector<2x64xf32> -> vector<2x64xf32>
    %307 = vector.broadcast %36 : vector<1x64xf32> to vector<2x64xf32>
    %308 = arith.addf %306, %307 : vector<2x64xf32>
    %309 = vector.extract_strided_slice %8 {offsets = [14, 0], sizes = [2, 64], strides = [1, 1]} : vector<16x64xf32> to vector<2x64xf32>
    %310 = arith.addf %309, %300 : vector<2x64xf32>
    %311 = arith.negf %310 : vector<2x64xf32>
    %312 = math.exp %311 : vector<2x64xf32>
    %cst_100 = arith.constant 1.000000e+00 : f32
    %313 = vector.broadcast %cst_100 : f32 to vector<2x64xf32>
    %314 = arith.addf %313, %312 : vector<2x64xf32>
    %315 = arith.divf %313, %314 : vector<2x64xf32>
    %316 = vector.extract_strided_slice %16 {offsets = [14, 0], sizes = [2, 64], strides = [1, 1]} : vector<16x64xf32> to vector<2x64xf32>
    %317 = arith.addf %316, %304 : vector<2x64xf32>
    %318 = arith.negf %317 : vector<2x64xf32>
    %319 = math.exp %318 : vector<2x64xf32>
    %cst_101 = arith.constant 1.000000e+00 : f32
    %320 = vector.broadcast %cst_101 : f32 to vector<2x64xf32>
    %321 = arith.addf %320, %319 : vector<2x64xf32>
    %322 = arith.divf %320, %321 : vector<2x64xf32>
    %323 = vector.extract_strided_slice %24 {offsets = [14, 0], sizes = [2, 64], strides = [1, 1]} : vector<16x64xf32> to vector<2x64xf32>
    %324 = arith.mulf %315, %308 : vector<2x64xf32>
    %325 = arith.addf %323, %324 : vector<2x64xf32>
    %326 = math.tanh %325 : vector<2x64xf32>
    %cst_102 = arith.constant 1.000000e+00 : f32
    %327 = vector.broadcast %cst_102 : f32 to vector<2x64xf32>
    %328 = arith.subf %327, %322 : vector<2x64xf32>
    %329 = arith.mulf %328, %326 : vector<2x64xf32>
    %330 = arith.mulf %322, %294 : vector<2x64xf32>
    %331 = arith.addf %329, %330 : vector<2x64xf32>
    %332 = vector.shape_cast %331 : vector<2x64xf32> to vector<2x1x64xf32>
    %c0_103 = arith.constant 0 : index
    %c7 = arith.constant 7 : index
    %c0_104 = arith.constant 0 : index
    %333 = vector.load %arg21[%c0_103, %c7, %c0_104] : memref<2x8x64xf32, #tpu.memory_space<vmem>>, vector<2x1x64xf32>
    tpu.vector_store %arg21[%c0_103, %c7, %c0_104], %332 {strides = array<i32>} : memref<2x8x64xf32, #tpu.memory_space<vmem>>, vector<2x1x64xf32>,
    %c0_105 = arith.constant 0 : index
    %c0_106 = arith.constant 0 : index
    %c0_107 = arith.constant 0 : index
    %334 = vector.load %arg21[%c0_105, %c0_106, %c0_107] : memref<2x8x64xf32, #tpu.memory_space<vmem>>, vector<2x8x64xf32>
    %335 = vector.shape_cast %334 : vector<2x8x64xf32> to vector<16x64xf32>
    %c0_108 = arith.constant 0 : index
    %c0_109 = arith.constant 0 : index
    %336 = vector.load %arg5[%c0_108, %c0_109] : memref<64x64xbf16, #tpu.memory_space<vmem>>, vector<64x64xbf16>
    %337 = arith.truncf %335 : vector<16x64xf32> to vector<16x64xbf16>
    %cst_110 = arith.constant dense<0.000000e+00> : vector<16x64xf32>
    %338 = tpu.matmul %337, %336, %cst_110 {dimension_numbers = #tpu.dot_dimension_numbers<[1], [0], [0], [1], [0, 0, 1, 1], [], []>} : vector<16x64xbf16>, vector<64x64xbf16>, vector<16x64xf32> -> vector<16x64xf32>
    %c0_111 = arith.constant 0 : index
    %c0_112 = arith.constant 0 : index
    %339 = vector.load %arg6[%c0_111, %c0_112] : memref<1x64xf32, #tpu.memory_space<vmem>>, vector<1x64xf32>
    %340 = vector.broadcast %339 : vector<1x64xf32> to vector<16x64xf32>
    %341 = arith.addf %338, %340 : vector<16x64xf32>
    %c0_113 = arith.constant 0 : index
    %c0_114 = arith.constant 0 : index
    %342 = vector.load %arg7[%c0_113, %c0_114] : memref<64x64xbf16, #tpu.memory_space<vmem>>, vector<64x64xbf16>
    %343 = arith.truncf %335 : vector<16x64xf32> to vector<16x64xbf16>
    %cst_115 = arith.constant dense<0.000000e+00> : vector<16x64xf32>
    %344 = tpu.matmul %343, %342, %cst_115 {dimension_numbers = #tpu.dot_dimension_numbers<[1], [0], [0], [1], [0, 0, 1, 1], [], []>} : vector<16x64xbf16>, vector<64x64xbf16>, vector<16x64xf32> -> vector<16x64xf32>
    %c0_116 = arith.constant 0 : index
    %c0_117 = arith.constant 0 : index
    %345 = vector.load %arg8[%c0_116, %c0_117] : memref<1x64xf32, #tpu.memory_space<vmem>>, vector<1x64xf32>
    %346 = vector.broadcast %345 : vector<1x64xf32> to vector<16x64xf32>
    %347 = arith.addf %344, %346 : vector<16x64xf32>
    %348 = vector.shape_cast %341 : vector<16x64xf32> to vector<2x8x64xf32>
    %349 = vector.shape_cast %347 : vector<16x64xf32> to vector<2x8x64xf32>
    %cst_118 = arith.constant dense<0.000000e+00> : vector<2x8x8xf32>
    %350 = tpu.matmul %348, %349, %cst_118 {dimension_numbers = #tpu.dot_dimension_numbers<[2], [2], [1], [1], [0, 0, 0, 1, 1, 1], [0], [0]>} : vector<2x8x64xf32>, vector<2x8x64xf32>, vector<2x8x8xf32> -> vector<2x8x8xf32>
    %cst_119 = arith.constant 1.250000e-01 : f32
    %351 = vector.broadcast %cst_119 : f32 to vector<2x8x8xf32>
    %352 = arith.mulf %350, %351 : vector<2x8x8xf32>
    %c0_120 = arith.constant 0 : index
    %c0_121 = arith.constant 0 : index
    %c0_122 = arith.constant 0 : index
    %353 = vector.load %arg9[%c0_120, %c0_121, %c0_122] : memref<2x8x8xf32, #tpu.memory_space<vmem>>, vector<2x8x8xf32>
    %cst_123 = arith.constant 0.000000e+00 : f32
    %354 = vector.broadcast %cst_123 : f32 to vector<2x8x8xf32>
    %355 = arith.cmpf ogt, %353, %354 : vector<2x8x8xf32>
    %cst_124 = arith.constant -1.000000e+30 : f32
    %356 = vector.broadcast %cst_124 : f32 to vector<2x8x8xf32>
    %357 = arith.select %355, %352, %356 : vector<2x8x8xi1>, vector<2x8x8xf32>
    %cst_125 = arith.constant dense<0xFF800000> : vector<2x8xf32>
    %358 = vector.multi_reduction <maximumf>, %357, %cst_125 [2] : vector<2x8x8xf32> to vector<2x8xf32>
    %359 = vector.shape_cast %358 : vector<2x8xf32> to vector<2x8x1xf32>
    %360 = vector.broadcast %359 : vector<2x8x1xf32> to vector<2x8x8xf32>
    %361 = arith.subf %357, %360 : vector<2x8x8xf32>
    %362 = math.exp %361 : vector<2x8x8xf32>
    %cst_126 = arith.constant 0.000000e+00 : f32
    %363 = vector.broadcast %cst_126 : f32 to vector<2x8x8xf32>
    %364 = arith.select %355, %362, %363 : vector<2x8x8xi1>, vector<2x8x8xf32>
    %cst_127 = arith.constant dense<0.000000e+00> : vector<2x8xf32>
    %365 = vector.multi_reduction <add>, %364, %cst_127 [2] : vector<2x8x8xf32> to vector<2x8xf32>
    %366 = vector.shape_cast %365 : vector<2x8xf32> to vector<2x8x1xf32>
    %cst_128 = arith.constant 9.99999968E-21 : f32
    %367 = vector.broadcast %cst_128 : f32 to vector<2x8x1xf32>
    %368 = arith.maximumf %366, %367 : vector<2x8x1xf32>
    %369 = tpu.reciprocal %368 {approx = true} : vector<2x8x1xf32> -> vector<2x8x1xf32>
    %370 = vector.broadcast %369 : vector<2x8x1xf32> to vector<2x8x8xf32>
    %371 = arith.mulf %364, %370 : vector<2x8x8xf32>
    %c0_129 = arith.constant 0 : index
    %c0_130 = arith.constant 0 : index
    %c0_131 = arith.constant 0 : index
    %372 = vector.load %arg18[%c0_129, %c0_130, %c0_131] : memref<2x8x8xf32, #tpu.memory_space<vmem>>, vector<2x8x8xf32>
    tpu.vector_store %arg18[%c0_129, %c0_130, %c0_131], %371 {strides = array<i32>} : memref<2x8x8xf32, #tpu.memory_space<vmem>>, vector<2x8x8xf32>,
    %c0_132 = arith.constant 0 : index
    %c0_133 = arith.constant 0 : index
    %c0_134 = arith.constant 0 : index
    %373 = vector.load %arg10[%c0_132, %c0_133, %c0_134] : memref<2x8x8xf32, #tpu.memory_space<vmem>>, vector<2x8x8xf32>
    %374 = arith.mulf %371, %373 : vector<2x8x8xf32>
    %c0_135 = arith.constant 0 : index
    %c0_136 = arith.constant 0 : index
    %c0_137 = arith.constant 0 : index
    %375 = vector.load %arg11[%c0_135, %c0_136, %c0_137] : memref<2x8x8xf32, #tpu.memory_space<vmem>>, vector<2x8x8xf32>
    %376 = arith.mulf %371, %375 : vector<2x8x8xf32>
    %cst_138 = arith.constant dense<0.000000e+00> : vector<2x8x64xf32>
    %377 = tpu.matmul %374, %334, %cst_138 {dimension_numbers = #tpu.dot_dimension_numbers<[2], [1], [1], [2], [0, 0, 0, 1, 1, 2], [0], [0]>} : vector<2x8x8xf32>, vector<2x8x64xf32>, vector<2x8x64xf32> -> vector<2x8x64xf32>
    %378 = vector.shape_cast %377 : vector<2x8x64xf32> to vector<16x64xf32>
    %cst_139 = arith.constant dense<0.000000e+00> : vector<2x8x64xf32>
    %379 = tpu.matmul %376, %334, %cst_139 {dimension_numbers = #tpu.dot_dimension_numbers<[2], [1], [1], [2], [0, 0, 0, 1, 1, 2], [0], [0]>} : vector<2x8x8xf32>, vector<2x8x64xf32>, vector<2x8x64xf32> -> vector<2x8x64xf32>
    %380 = vector.shape_cast %379 : vector<2x8x64xf32> to vector<16x64xf32>
    %381 = tpu.concatenate %378, %380 in 1 : vector<16x64xf32>, vector<16x64xf32> -> vector<16x128xf32>
    %c0_140 = arith.constant 0 : index
    %c0_141 = arith.constant 0 : index
    %382 = vector.load %arg12[%c0_140, %c0_141] : memref<128x64xbf16, #tpu.memory_space<vmem>>, vector<128x64xbf16>
    %383 = arith.truncf %381 : vector<16x128xf32> to vector<16x128xbf16>
    %cst_142 = arith.constant dense<0.000000e+00> : vector<16x64xf32>
    %384 = tpu.matmul %383, %382, %cst_142 {dimension_numbers = #tpu.dot_dimension_numbers<[1], [0], [0], [1], [0, 0, 1, 1], [], []>} : vector<16x128xbf16>, vector<128x64xbf16>, vector<16x64xf32> -> vector<16x64xf32>
    %385 = arith.negf %384 : vector<16x64xf32>
    %386 = math.exp %385 : vector<16x64xf32>
    %cst_143 = arith.constant 1.000000e+00 : f32
    %387 = vector.broadcast %cst_143 : f32 to vector<16x64xf32>
    %388 = arith.addf %387, %386 : vector<16x64xf32>
    %389 = arith.divf %387, %388 : vector<16x64xf32>
    %390 = vector.shape_cast %389 : vector<16x64xf32> to vector<2x8x64xf32>
    %cst_144 = arith.constant dense<0.000000e+00> : vector<2x8x64xf32>
    %391 = tpu.matmul %374, %390, %cst_144 {dimension_numbers = #tpu.dot_dimension_numbers<[2], [1], [1], [2], [0, 0, 0, 1, 1, 2], [0], [0]>} : vector<2x8x8xf32>, vector<2x8x64xf32>, vector<2x8x64xf32> -> vector<2x8x64xf32>
    %392 = vector.shape_cast %391 : vector<2x8x64xf32> to vector<16x64xf32>
    %cst_145 = arith.constant dense<0.000000e+00> : vector<2x8x64xf32>
    %393 = tpu.matmul %376, %390, %cst_145 {dimension_numbers = #tpu.dot_dimension_numbers<[2], [1], [1], [2], [0, 0, 0, 1, 1, 2], [0], [0]>} : vector<2x8x8xf32>, vector<2x8x64xf32>, vector<2x8x64xf32> -> vector<2x8x64xf32>
    %394 = vector.shape_cast %393 : vector<2x8x64xf32> to vector<16x64xf32>
    %395 = tpu.concatenate %392, %394 in 1 : vector<16x64xf32>, vector<16x64xf32> -> vector<16x128xf32>
    %c0_146 = arith.constant 0 : index
    %c0_147 = arith.constant 0 : index
    %396 = vector.load %arg13[%c0_146, %c0_147] : memref<128x64xbf16, #tpu.memory_space<vmem>>, vector<128x64xbf16>
    %397 = arith.truncf %395 : vector<16x128xf32> to vector<16x128xbf16>
    %cst_148 = arith.constant dense<0.000000e+00> : vector<16x64xf32>
    %398 = tpu.matmul %397, %396, %cst_148 {dimension_numbers = #tpu.dot_dimension_numbers<[1], [0], [0], [1], [0, 0, 1, 1], [], []>} : vector<16x128xbf16>, vector<128x64xbf16>, vector<16x64xf32> -> vector<16x64xf32>
    %399 = tpu.concatenate %335, %398 in 1 : vector<16x64xf32>, vector<16x64xf32> -> vector<16x128xf32>
    %c0_149 = arith.constant 0 : index
    %c0_150 = arith.constant 0 : index
    %400 = vector.load %arg19[%c0_149, %c0_150] : memref<16x128xf32, #tpu.memory_space<vmem>>, vector<16x128xf32>
    tpu.vector_store %arg19[%c0_149, %c0_150], %399 {strides = array<i32>} : memref<16x128xf32, #tpu.memory_space<vmem>>, vector<16x128xf32>,
    %c0_151 = arith.constant 0 : index
    %c0_152 = arith.constant 0 : index
    %401 = vector.load %arg14[%c0_151, %c0_152] : memref<128x64xbf16, #tpu.memory_space<vmem>>, vector<128x64xbf16>
    %402 = arith.truncf %399 : vector<16x128xf32> to vector<16x128xbf16>
    %cst_153 = arith.constant dense<0.000000e+00> : vector<16x64xf32>
    %403 = tpu.matmul %402, %401, %cst_153 {dimension_numbers = #tpu.dot_dimension_numbers<[1], [0], [0], [1], [0, 0, 1, 1], [], []>} : vector<16x128xbf16>, vector<128x64xbf16>, vector<16x64xf32> -> vector<16x64xf32>
    %c0_154 = arith.constant 0 : index
    %c0_155 = arith.constant 0 : index
    %404 = vector.load %arg15[%c0_154, %c0_155] : memref<1x64xf32, #tpu.memory_space<vmem>>, vector<1x64xf32>
    %405 = vector.broadcast %404 : vector<1x64xf32> to vector<16x64xf32>
    %406 = arith.addf %403, %405 : vector<16x64xf32>
    %cst_156 = arith.constant 0.000000e+00 : f32
    %407 = vector.broadcast %cst_156 : f32 to vector<16x64xf32>
    %408 = arith.maximumf %406, %407 : vector<16x64xf32>
    %c0_157 = arith.constant 0 : index
    %c0_158 = arith.constant 0 : index
    %409 = vector.load %arg16[%c0_157, %c0_158] : memref<64x128xbf16, #tpu.memory_space<vmem>>, vector<64x128xbf16>
    %410 = arith.truncf %408 : vector<16x64xf32> to vector<16x64xbf16>
    %cst_159 = arith.constant dense<0.000000e+00> : vector<16x128xf32>
    %411 = tpu.matmul %410, %409, %cst_159 {dimension_numbers = #tpu.dot_dimension_numbers<[1], [0], [0], [1], [0, 0, 1, 1], [], []>} : vector<16x64xbf16>, vector<64x128xbf16>, vector<16x128xf32> -> vector<16x128xf32>
    %c0_160 = arith.constant 0 : index
    %c0_161 = arith.constant 0 : index
    %412 = vector.load %arg17[%c0_160, %c0_161] : memref<1x128xf32, #tpu.memory_space<vmem>>, vector<1x128xf32>
    %413 = vector.broadcast %412 : vector<1x128xf32> to vector<16x128xf32>
    %414 = arith.addf %411, %413 : vector<16x128xf32>
    %cst_162 = arith.constant dense<0xFF800000> : vector<16xf32>
    %415 = vector.multi_reduction <maximumf>, %414, %cst_162 [1] : vector<16x128xf32> to vector<16xf32>
    %416 = vector.shape_cast %415 : vector<16xf32> to vector<16x1xf32>
    %417 = vector.broadcast %416 : vector<16x1xf32> to vector<16x128xf32>
    %418 = arith.subf %414, %417 : vector<16x128xf32>
    %419 = math.exp %418 : vector<16x128xf32>
    %cst_163 = arith.constant dense<0.000000e+00> : vector<16xf32>
    %420 = vector.multi_reduction <add>, %419, %cst_163 [1] : vector<16x128xf32> to vector<16xf32>
    %421 = vector.shape_cast %420 : vector<16xf32> to vector<16x1xf32>
    %422 = math.log %421 : vector<16x1xf32>
    %423 = arith.addf %422, %416 : vector<16x1xf32>
    %424 = vector.broadcast %423 : vector<16x1xf32> to vector<16x128xf32>
    %425 = arith.subf %414, %424 : vector<16x128xf32>
    %c0_164 = arith.constant 0 : index
    %c0_165 = arith.constant 0 : index
    %426 = vector.load %arg20[%c0_164, %c0_165] : memref<16x128xf32, #tpu.memory_space<vmem>>, vector<16x128xf32>
    tpu.vector_store %arg20[%c0_164, %c0_165], %425 {strides = array<i32>} : memref<16x128xf32, #tpu.memory_space<vmem>>, vector<16x128xf32>,
    return
  }
}

</mosaic_0001>

<llo_original>
// kernel: tpu_custom_call.1
$region0: #{tpu_custom_call.1}
  #allocation0 [shape = 'u32[]', space=smem, size = 0x4, offset = 0x4, fixed_abs, tag = 'smem constant byte address 0x4 - core index']
  #allocation1 [shape = 'u32[72,128]{1,0:T(1,128)}', space=vmem, size = 0x9000, scoped, tag = 'internal scratch']
  #allocation2 [shape = 'f32[2,8,64]{2,1,0:T(8,128)}', space=vmem, size = 0x2000, scoped, tag = 'scratch operand']
  %s0 = inlined_call_operand.vmem [shape: f32[16,32], index: 0, kind: input, shape index: {}]
  %s1 = inlined_call_operand.vmem [shape: bf16[3,32,64], index: 1, kind: input, shape index: {}]
  %s2 = inlined_call_operand.vmem [shape: bf16[3,64,64], index: 2, kind: input, shape index: {}]
  %s3 = inlined_call_operand.hbm [shape: f32[3,1,64], index: 3, kind: input, shape index: {}]
  %s4 = inlined_call_operand.vmem [shape: f32[3,1,64], index: 4, kind: input, shape index: {}]
  %s5 = inlined_call_operand.vmem [shape: bf16[64,64], index: 5, kind: input, shape index: {}]
  %s6 = inlined_call_operand.hbm [shape: f32[1,64], index: 6, kind: input, shape index: {}]
  %s7 = inlined_call_operand.vmem [shape: bf16[64,64], index: 7, kind: input, shape index: {}]
  %s8 = inlined_call_operand.vmem [shape: f32[1,64], index: 8, kind: input, shape index: {}]
  %s9 = inlined_call_operand.hbm [shape: f32[2,8,8], index: 9, kind: input, shape index: {}]
  %s10 = inlined_call_operand.hbm [shape: f32[2,8,8], index: 10, kind: input, shape index: {}]
  %s11 = inlined_call_operand.hbm [shape: f32[2,8,8], index: 11, kind: input, shape index: {}]
  %s12 = inlined_call_operand.vmem [shape: bf16[128,64], index: 12, kind: input, shape index: {}]
  %s13 = inlined_call_operand.vmem [shape: bf16[128,64], index: 13, kind: input, shape index: {}]
  %s14 = inlined_call_operand.vmem [shape: bf16[128,64], index: 14, kind: input, shape index: {}]
  %s15 = inlined_call_operand.vmem [shape: f32[1,64], index: 15, kind: input, shape index: {}]
  %s16 = inlined_call_operand.hbm [shape: bf16[64,128], index: 16, kind: input, shape index: {}]
  %s17 = inlined_call_operand.vmem [shape: f32[1,128], index: 17, kind: input, shape index: {}]
  %s18 = inlined_call_operand.hbm [shape: f32[2,8,8], index: 18, kind: output, shape index: {0}]
  %s19 = inlined_call_operand.hbm [shape: f32[16,128], index: 19, kind: output, shape index: {1}]
  %s20 = inlined_call_operand.hbm [shape: f32[16,128], index: 20, kind: output, shape index: {2}]
  %21 = xla_tuple %s18, %s19, %s20
  %s22 = sld [smem:[#allocation0]]
  $region122: #{tpu_custom_call.1} parent=0
    _
  %s24 = ssub.s32 1, %s22
  %s25 = scalar_select 0, %s24, %s22
  $region1: #{tpu_custom_call.1} parent=0
    #allocation3 [shape = 'u8[1536]{0}', space=vmem, size = 0x800, scoped, tag = 'input window, operand 3, single buffered']
    #allocation4 [shape = 's32[1]{0}', space=sflag, size = 0x4, scoped, tag = 'scoped memory for tpu_custom_call.1']
    #allocation5 [shape = 's32[1]{0}', space=sflag, size = 0x4, scoped, tag = 'scoped memory for tpu_custom_call.1']
    #allocation6 [shape = 'u8[512]{0}', space=vmem, size = 0x400, scoped, tag = 'input window, operand 6, single buffered']
    #allocation7 [shape = 's32[1]{0}', space=sflag, size = 0x4, scoped, tag = 'scoped memory for tpu_custom_call.1']
    #allocation8 [shape = 'u8[8192]{0}', space=vmem, size = 0x2000, scoped, tag = 'input window, operand 9, single buffered']
    #allocation9 [shape = 'u8[8192]{0}', space=vmem, size = 0x2000, scoped, tag = 'input window, operand 10, single buffered']
    #allocation10 [shape = 's32[1]{0}', space=sflag, size = 0x4, scoped, tag = 'scoped memory for tpu_custom_call.1']
    #allocation11 [shape = 'u8[8192]{0}', space=vmem, size = 0x2000, scoped, tag = 'input window, operand 11, single buffered']
    #allocation12 [shape = 'u8[16384]{0}', space=vmem, size = 0x4000, scoped, tag = 'input window, operand 16, single buffered']
    #allocation13 [shape = 's32[1]{0}', space=sflag, size = 0x4, scoped, tag = 'scoped memory for tpu_custom_call.1']
    #allocation14 [shape = 'u8[8192]{0}', space=vmem, size = 0x2000, scoped, tag = 'output window, operand 0, single buffered']
    #allocation15 [shape = 'u8[8192]{0}', space=vmem, size = 0x2000, scoped, tag = 'output window, operand 1, single buffered']
    #allocation16 [shape = 's32[1]{0}', space=sflag, size = 0x4, scoped, tag = 'scoped memory for tpu_custom_call.1']
    #allocation17 [shape = 'u8[8192]{0}', space=vmem, size = 0x2000, scoped, tag = 'output window, operand 2, single buffered']
    %26 = vsyncpa [#allocation4], 0
    %27 = vsyncpa [#allocation7], 0
    %28 = vsyncpa [#allocation10], 0
    %29 = vsyncpa [#allocation13], 0
    %30 = vsyncpa [#allocation5], 0
    %31 = vsyncpa [#allocation16], 0
    // Predicated region
    $region2: #{tpu_custom_call.1} parent=1 // pred_check
      _
    $region3: #{tpu_custom_call.1} parent=1 // pred_check_branch
      %33 = sbr.rel (0) target = $region5
    $region4: #{tpu_custom_call.1} parent=1 // pred_region
      _
    $region5: #{tpu_custom_call.1} parent=1 // pred_fallthru
      _
    // Predicated region
    $region6: #{tpu_custom_call.1} parent=1 // pred_check
      _
    $region7: #{tpu_custom_call.1} parent=1 // pred_check_branch
      %35 = sbr.rel (0) target = $region9
    $region8: #{tpu_custom_call.1} parent=1 // pred_region
      _
    $region9: #{tpu_custom_call.1} parent=1 // pred_fallthru
      _
    // Predicated region
    $region10: #{tpu_custom_call.1} parent=1 // pred_check
      _
    $region11: #{tpu_custom_call.1} parent=1 // pred_check_branch
      %37 = sbr.rel (0) target = $region13
    $region12: #{tpu_custom_call.1} parent=1 // pred_region
      _
    $region13: #{tpu_custom_call.1} parent=1 // pred_fallthru
      _
    // Predicated region
    $region14: #{tpu_custom_call.1} parent=1 // pred_check
      _
    $region15: #{tpu_custom_call.1} parent=1 // pred_check_branch
      %39 = sbr.rel (0) target = $region17
    $region16: #{tpu_custom_call.1} parent=1 // pred_region
      %41 = vsyncadd [#allocation4], 0
      %s42 = sshll.u32 %s3, 4
      %s43 = int_to_ptr.hbm [resolvable:$true] %s42
      %s44 = sshll.u32 [#allocation3], 4
      %s45 = int_to_ptr.vmem [resolvable:$true] %s44
      %50 = dma.hbm_to_vmem [thread:$0]  %s43, 48, %s45, [#allocation4], 16, 16, 1
    $region17: #{tpu_custom_call.1} parent=1 // pred_fallthru
      _
    // Predicated region
    $region18: #{tpu_custom_call.1} parent=1 // pred_check
      _
    $region19: #{tpu_custom_call.1} parent=1 // pred_check_branch
      %52 = sbr.rel (0) target = $region21
    $region20: #{tpu_custom_call.1} parent=1 // pred_region
      _
    $region21: #{tpu_custom_call.1} parent=1 // pred_fallthru
      _
    // Predicated region
    $region22: #{tpu_custom_call.1} parent=1 // pred_check
      _
    $region23: #{tpu_custom_call.1} parent=1 // pred_check_branch
      %54 = sbr.rel (0) target = $region25
    $region24: #{tpu_custom_call.1} parent=1 // pred_region
      _
    $region25: #{tpu_custom_call.1} parent=1 // pred_fallthru
      _
    // Predicated region
    $region26: #{tpu_custom_call.1} parent=1 // pred_check
      _
    $region27: #{tpu_custom_call.1} parent=1 // pred_check_branch
      %56 = sbr.rel (0) target = $region29
    $region28: #{tpu_custom_call.1} parent=1 // pred_region
      %58 = vsyncadd [#allocation7], 0
      %s60 = sshll.u32 %s6, 4
      %s61 = int_to_ptr.hbm [resolvable:$true] %s60
      %s62 = sshll.u32 [#allocation6], 4
      %s63 = int_to_ptr.vmem [resolvable:$true] %s62
      %65 = dma.hbm_to_vmem [thread:$0]  %s61, 16, %s63, [#allocation7]
    $region29: #{tpu_custom_call.1} parent=1 // pred_fallthru
      _
    // Predicated region
    $region30: #{tpu_custom_call.1} parent=1 // pred_check
      _
    $region31: #{tpu_custom_call.1} parent=1 // pred_check_branch
      %67 = sbr.rel (0) target = $region33
    $region32: #{tpu_custom_call.1} parent=1 // pred_region
      _
    $region33: #{tpu_custom_call.1} parent=1 // pred_fallthru
      _
    // Predicated region
    $region34: #{tpu_custom_call.1} parent=1 // pred_check
      _
    $region35: #{tpu_custom_call.1} parent=1 // pred_check_branch
      %69 = sbr.rel (0) target = $region37
    $region36: #{tpu_custom_call.1} parent=1 // pred_region
      _
    $region37: #{tpu_custom_call.1} parent=1 // pred_fallthru
      _
    // Predicated region
    $region38: #{tpu_custom_call.1} parent=1 // pred_check
      _
    $region39: #{tpu_custom_call.1} parent=1 // pred_check_branch
      %71 = sbr.rel (0) target = $region41
    $region40: #{tpu_custom_call.1} parent=1 // pred_region
      %73 = vsyncadd [#allocation7], 0
      %s74 = sshll.u32 %s9, 4
      %s75 = int_to_ptr.hbm [resolvable:$true] %s74
      %s76 = sshll.u32 [#allocation8], 4
      %s77 = int_to_ptr.vmem [resolvable:$true] %s76
      %82 = dma.hbm_to_vmem [thread:$0]  %s75, 256, %s77, [#allocation7], 128, 128, 8
    $region41: #{tpu_custom_call.1} parent=1 // pred_fallthru
      _
    // Predicated region
    $region42: #{tpu_custom_call.1} parent=1 // pred_check
      _
    $region43: #{tpu_custom_call.1} parent=1 // pred_check_branch
      %84 = sbr.rel (0) target = $region45
    $region44: #{tpu_custom_call.1} parent=1 // pred_region
      %86 = vsyncadd [#allocation10], 0
      %s87 = sshll.u32 %s10, 4
      %s88 = int_to_ptr.hbm [resolvable:$true] %s87
      %s89 = sshll.u32 [#allocation9], 4
      %s90 = int_to_ptr.vmem [resolvable:$true] %s89
      %95 = dma.hbm_to_vmem [thread:$0]  %s88, 256, %s90, [#allocation10], 128, 128, 8
    $region45: #{tpu_custom_call.1} parent=1 // pred_fallthru
      _
    // Predicated region
    $region46: #{tpu_custom_call.1} parent=1 // pred_check
      _
    $region47: #{tpu_custom_call.1} parent=1 // pred_check_branch
      %97 = sbr.rel (0) target = $region49
    $region48: #{tpu_custom_call.1} parent=1 // pred_region
      %99 = vsyncadd [#allocation10], 0
      %s100 = sshll.u32 %s11, 4
      %s101 = int_to_ptr.hbm [resolvable:$true] %s100
      %s102 = sshll.u32 [#allocation11], 4
      %s103 = int_to_ptr.vmem [resolvable:$true] %s102
      %108 = dma.hbm_to_vmem [thread:$0]  %s101, 256, %s103, [#allocation10], 128, 128, 8
    $region49: #{tpu_custom_call.1} parent=1 // pred_fallthru
      _
    // Predicated region
    $region50: #{tpu_custom_call.1} parent=1 // pred_check
      _
    $region51: #{tpu_custom_call.1} parent=1 // pred_check_branch
      %110 = sbr.rel (0) target = $region53
    $region52: #{tpu_custom_call.1} parent=1 // pred_region
      _
    $region53: #{tpu_custom_call.1} parent=1 // pred_fallthru
      _
    // Predicated region
    $region54: #{tpu_custom_call.1} parent=1 // pred_check
      _
    $region55: #{tpu_custom_call.1} parent=1 // pred_check_branch
      %112 = sbr.rel (0) target = $region57
    $region56: #{tpu_custom_call.1} parent=1 // pred_region
      _
    $region57: #{tpu_custom_call.1} parent=1 // pred_fallthru
      _
    // Predicated region
    $region58: #{tpu_custom_call.1} parent=1 // pred_check
      _
    $region59: #{tpu_custom_call.1} parent=1 // pred_check_branch
      %114 = sbr.rel (0) target = $region61
    $region60: #{tpu_custom_call.1} parent=1 // pred_region
      _
    $region61: #{tpu_custom_call.1} parent=1 // pred_fallthru
      _
    // Predicated region
    $region62: #{tpu_custom_call.1} parent=1 // pred_check
      _
    $region63: #{tpu_custom_call.1} parent=1 // pred_check_branch
      %116 = sbr.rel (0) target = $region65
    $region64: #{tpu_custom_call.1} parent=1 // pred_region
      _
    $region65: #{tpu_custom_call.1} parent=1 // pred_fallthru
      _
    // Predicated region
    $region66: #{tpu_custom_call.1} parent=1 // pred_check
      _
    $region67: #{tpu_custom_call.1} parent=1 // pred_check_branch
      %118 = sbr.rel (0) target = $region69
    $region68: #{tpu_custom_call.1} parent=1 // pred_region
      %120 = vsyncadd [#allocation13], 0
      %s121 = sshll.u32 %s16, 4
      %s122 = int_to_ptr.hbm [resolvable:$true] %s121
      %s123 = sshll.u32 [#allocation12], 4
      %s124 = int_to_ptr.vmem [resolvable:$true] %s123
      %129 = dma.hbm_to_vmem [thread:$0]  %s122, 512, %s124, [#allocation13], 64, 64, 4
    $region69: #{tpu_custom_call.1} parent=1 // pred_fallthru
      _
    // Predicated region
    $region70: #{tpu_custom_call.1} parent=1 // pred_check
      _
    $region71: #{tpu_custom_call.1} parent=1 // pred_check_branch
      %131 = sbr.rel (0) target = $region73
    $region72: #{tpu_custom_call.1} parent=1 // pred_region
      _
    $region73: #{tpu_custom_call.1} parent=1 // pred_fallthru
      _
    // Predicated region
    $region74: #{tpu_custom_call.1} parent=1 // pred_check
      _
    $region75: #{tpu_custom_call.1} parent=1 // pred_check_branch
      %133 = sbr.rel (0) target = $region77
    $region76: #{tpu_custom_call.1} parent=1 // pred_region
      %135 = dma.done [#allocation4], 48
    $region77: #{tpu_custom_call.1} parent=1 // pred_fallthru
      _
    // Predicated region
    $region78: #{tpu_custom_call.1} parent=1 // pred_check
      _
    $region79: #{tpu_custom_call.1} parent=1 // pred_check_branch
      %137 = sbr.rel (0) target = $region81
    $region80: #{tpu_custom_call.1} parent=1 // pred_region
      %139 = dma.done [#allocation7], 16
    $region81: #{tpu_custom_call.1} parent=1 // pred_fallthru
      _
    // Predicated region
    $region82: #{tpu_custom_call.1} parent=1 // pred_check
      _
    $region83: #{tpu_custom_call.1} parent=1 // pred_check_branch
      %141 = sbr.rel (0) target = $region85
    $region84: #{tpu_custom_call.1} parent=1 // pred_region
      %143 = dma.done [#allocation7], 256
    $region85: #{tpu_custom_call.1} parent=1 // pred_fallthru
      _
    // Predicated region
    $region86: #{tpu_custom_call.1} parent=1 // pred_check
      _
    $region87: #{tpu_custom_call.1} parent=1 // pred_check_branch
      %145 = sbr.rel (0) target = $region89
    $region88: #{tpu_custom_call.1} parent=1 // pred_region
      %147 = dma.done [#allocation10], 256
    $region89: #{tpu_custom_call.1} parent=1 // pred_fallthru
      _
    // Predicated region
    $region90: #{tpu_custom_call.1} parent=1 // pred_check
      _
    $region91: #{tpu_custom_call.1} parent=1 // pred_check_branch
      %149 = sbr.rel (0) target = $region93
    $region92: #{tpu_custom_call.1} parent=1 // pred_region
      %151 = dma.done [#allocation10], 256
    $region93: #{tpu_custom_call.1} parent=1 // pred_fallthru
      _
    // Predicated region
    $region94: #{tpu_custom_call.1} parent=1 // pred_check
      _
    $region95: #{tpu_custom_call.1} parent=1 // pred_check_branch
      %153 = sbr.rel (0) target = $region97
    $region96: #{tpu_custom_call.1} parent=1 // pred_region
      %155 = dma.done [#allocation13], 512
    $region97: #{tpu_custom_call.1} parent=1 // pred_fallthru
      _
    %v157 = vld [vmem:[%s0] sm:$0xff]
    %v158 = vld [vmem:[%s0 + $0x8] sm:$0xff]
    %v159 = vld [vmem:[%s1] sm:$0xf]
    %v160 = vld [vmem:[%s1 + $0x4] sm:$0xf]
    %v161 = vld [vmem:[%s1 + $0x8] sm:$0xf]
    %v162 = vld [vmem:[%s1 + $0xc] sm:$0xf]
    %v163 = vpack.c.bf16 %v158, %v157
    %v164 = vld [vmem:[#allocation3] sm:$0x1]
    %v166 = vperm.slane %v164, 0
    %v172 = vunpack.c.l.b16 %v159
    %v173 = vunpack.c.l.b16 %v160
    %v174 = vunpack.c.l.b16 %v161
    %v175 = vunpack.c.l.b16 %v162
    %v176 = vpack.c.b16 %v173, %v172
    %v177 = vpack.c.b16 %v175, %v174
    %vm180 = vcmask 261120
    %v182 = vsel %vm180, %v163, 0
    %184 = vmatpush.bf16.msra.mxu0 0
    %185 = vmatpush.bf16.msra.mxu0 0
    %186 = vmatpush.bf16.msra.mxu0 0
    %187 = vmatpush.bf16.msra.mxu0 0
    %188 = vmatpush.bf16.msra.mxu0 0
    %189 = vmatpush.bf16.msra.mxu0 0
    %190 = vmatpush.bf16.msra.mxu0 %v177
    %191 = vmatpush.bf16.msra.mxu0 %v176
    %192 = vmatmul.bf16.gmra.mxu0 %v182
    %v193 = vpop.f32.mrf.mxu0
    %v194 = vadd.f32 %v166, %v193
    %v195 = vpop.f32.mrf.mxu0
    %v196 = vadd.f32 %v166, %v195
    %197 = vdwg.mxu0
    %s198 = scalar_lea.vmem %s1, 16
    %v199 = vld [vmem:[%s198] sm:$0xf]
    %v200 = vld [vmem:[%s198 + $0x4] sm:$0xf]
    %v201 = vld [vmem:[%s198 + $0x8] sm:$0xf]
    %v202 = vld [vmem:[%s198 + $0xc] sm:$0xf]
    %s203 = scalar_lea.vmem [#allocation3], 1
    %v204 = vld [vmem:[%s203] sm:$0x1]
    %v206 = vperm.slane %v204, 0
    %v212 = vunpack.c.l.b16 %v199
    %v213 = vunpack.c.l.b16 %v200
    %v214 = vunpack.c.l.b16 %v201
    %v215 = vunpack.c.l.b16 %v202
    %v216 = vpack.c.b16 %v213, %v212
    %v217 = vpack.c.b16 %v215, %v214
    %220 = vmatpush.bf16.msra.mxu0 0
    %221 = vmatpush.bf16.msra.mxu0 0
    %222 = vmatpush.bf16.msra.mxu0 0
    %223 = vmatpush.bf16.msra.mxu0 0
    %224 = vmatpush.bf16.msra.mxu0 0
    %225 = vmatpush.bf16.msra.mxu0 0
    %226 = vmatpush.bf16.msra.mxu0 %v217
    %227 = vmatpush.bf16.msra.mxu0 %v216
    %228 = vmatmul.bf16.gmra.mxu0 %v182
    %v229 = vpop.f32.mrf.mxu0
    %v230 = vadd.f32 %v206, %v229
    %v231 = vpop.f32.mrf.mxu0
    %v232 = vadd.f32 %v206, %v231
    %233 = vdwg.mxu0
    %s234 = scalar_lea.vmem %s1, 32
    %v235 = vld [vmem:[%s234] sm:$0xf]
    %v236 = vld [vmem:[%s234 + $0x4] sm:$0xf]
    %v237 = vld [vmem:[%s234 + $0x8] sm:$0xf]
    %v238 = vld [vmem:[%s234 + $0xc] sm:$0xf]
    %s239 = scalar_lea.vmem [#allocation3], 2
    %v240 = vld [vmem:[%s239] sm:$0x1]
    %v242 = vperm.slane %v240, 0
    %v248 = vunpack.c.l.b16 %v235
    %v249 = vunpack.c.l.b16 %v236
    %v250 = vunpack.c.l.b16 %v237
    %v251 = vunpack.c.l.b16 %v238
    %v252 = vpack.c.b16 %v249, %v248
    %v253 = vpack.c.b16 %v251, %v250
    %256 = vmatpush.bf16.msra.mxu0 0
    %257 = vmatpush.bf16.msra.mxu0 0
    %258 = vmatpush.bf16.msra.mxu0 0
    %259 = vmatpush.bf16.msra.mxu0 0
    %260 = vmatpush.bf16.msra.mxu0 0
    %261 = vmatpush.bf16.msra.mxu0 0
    %262 = vmatpush.bf16.msra.mxu0 %v253
    %263 = vmatpush.bf16.msra.mxu0 %v252
    %264 = vmatmul.bf16.gmra.mxu0 %v182
    %v265 = vpop.f32.mrf.mxu0
    %v266 = vadd.f32 %v242, %v265
    %v267 = vpop.f32.mrf.mxu0
    %v268 = vadd.f32 %v242, %v267
    %269 = vdwg.mxu0
    %v270 = vld [vmem:[%s2] sm:$0xf]
    %v271 = vld [vmem:[%s2 + $0x4] sm:$0xf]
    %v272 = vld [vmem:[%s2 + $0x8] sm:$0xf]
    %v273 = vld [vmem:[%s2 + $0xc] sm:$0xf]
    %v274 = vld [vmem:[%s2 + $0x10] sm:$0xf]
    %v275 = vld [vmem:[%s2 + $0x14] sm:$0xf]
    %v276 = vld [vmem:[%s2 + $0x18] sm:$0xf]
    %v277 = vld [vmem:[%s2 + $0x1c] sm:$0xf]
    %s278 = scalar_lea.vmem %s2, 32
    %v279 = vld [vmem:[%s278] sm:$0xf]
    %v280 = vld [vmem:[%s278 + $0x4] sm:$0xf]
    %v281 = vld [vmem:[%s278 + $0x8] sm:$0xf]
    %v282 = vld [vmem:[%s278 + $0xc] sm:$0xf]
    %v283 = vld [vmem:[%s278 + $0x10] sm:$0xf]
    %v284 = vld [vmem:[%s278 + $0x14] sm:$0xf]
    %v285 = vld [vmem:[%s278 + $0x18] sm:$0xf]
    %v286 = vld [vmem:[%s278 + $0x1c] sm:$0xf]
    %s287 = scalar_lea.vmem %s2, 64
    %v288 = vld [vmem:[%s287] sm:$0xf]
    %v289 = vld [vmem:[%s287 + $0x4] sm:$0xf]
    %v290 = vld [vmem:[%s287 + $0x8] sm:$0xf]
    %v291 = vld [vmem:[%s287 + $0xc] sm:$0xf]
    %v292 = vld [vmem:[%s287 + $0x10] sm:$0xf]
    %v293 = vld [vmem:[%s287 + $0x14] sm:$0xf]
    %v294 = vld [vmem:[%s287 + $0x18] sm:$0xf]
    %v295 = vld [vmem:[%s287 + $0x1c] sm:$0xf]
    %v296 = vld [vmem:[%s4] sm:$0x1]
    %s297 = scalar_lea.vmem %s4, 1
    %v298 = vld [vmem:[%s297] sm:$0x1]
    %s299 = scalar_lea.vmem %s4, 2
    %v300 = vld [vmem:[%s299] sm:$0x1]
    %v302 = vperm.slane %v296, 0
    %v312 = vunpack.c.l.b16 %v270
    %v313 = vunpack.c.l.b16 %v271
    %v314 = vunpack.c.l.b16 %v272
    %v315 = vunpack.c.l.b16 %v273
    %v316 = vunpack.c.l.b16 %v274
    %v317 = vunpack.c.l.b16 %v275
    %v318 = vunpack.c.l.b16 %v276
    %v319 = vunpack.c.l.b16 %v277
    %v320 = vpack.c.b16 %v313, %v312
    %v321 = vpack.c.b16 %v315, %v314
    %v322 = vpack.c.b16 %v317, %v316
    %v323 = vpack.c.b16 %v319, %v318
    %vm328 = vcmask 523264
    %v330 = vsel %vm328, 0, 0
    %332 = vmatpush.bf16.msra.mxu0 0
    %333 = vmatpush.bf16.msra.mxu0 0
    %334 = vmatpush.bf16.msra.mxu0 0
    %335 = vmatpush.bf16.msra.mxu0 0
    %336 = vmatpush.bf16.msra.mxu0 %v323
    %337 = vmatpush.bf16.msra.mxu0 %v322
    %338 = vmatpush.bf16.msra.mxu0 %v321
    %339 = vmatpush.bf16.msra.mxu0 %v320
    %340 = vmatmul.bf16.gmra.mxu0 %v330
    %v341 = vpop.f32.mrf.mxu0
    %v342 = vadd.f32 %v302, %v341
    %v343 = vpop.f32.mrf.mxu0
    %344 = vdwg.mxu0
    %v346 = vperm.slane %v298, 0
    %v356 = vunpack.c.l.b16 %v279
    %v357 = vunpack.c.l.b16 %v280
    %v358 = vunpack.c.l.b16 %v281
    %v359 = vunpack.c.l.b16 %v282
    %v360 = vunpack.c.l.b16 %v283
    %v361 = vunpack.c.l.b16 %v284
    %v362 = vunpack.c.l.b16 %v285
    %v363 = vunpack.c.l.b16 %v286
    %v364 = vpack.c.b16 %v357, %v356
    %v365 = vpack.c.b16 %v359, %v358
    %v366 = vpack.c.b16 %v361, %v360
    %v367 = vpack.c.b16 %v363, %v362
    %372 = vmatpush.bf16.msra.mxu0 0
    %373 = vmatpush.bf16.msra.mxu0 0
    %374 = vmatpush.bf16.msra.mxu0 0
    %375 = vmatpush.bf16.msra.mxu0 0
    %376 = vmatpush.bf16.msra.mxu0 %v367
    %377 = vmatpush.bf16.msra.mxu0 %v366
    %378 = vmatpush.bf16.msra.mxu0 %v365
    %379 = vmatpush.bf16.msra.mxu0 %v364
    %380 = vmatmul.bf16.gmra.mxu0 %v330
    %v381 = vpop.f32.mrf.mxu0
    %v382 = vadd.f32 %v346, %v381
    %v383 = vpop.f32.mrf.mxu0
    %384 = vdwg.mxu0
    %v386 = vperm.slane %v300, 0
    %v396 = vunpack.c.l.b16 %v288
    %v397 = vunpack.c.l.b16 %v289
    %v398 = vunpack.c.l.b16 %v290
    %v399 = vunpack.c.l.b16 %v291
    %v400 = vunpack.c.l.b16 %v292
    %v401 = vunpack.c.l.b16 %v293
    %v402 = vunpack.c.l.b16 %v294
    %v403 = vunpack.c.l.b16 %v295
    %v404 = vpack.c.b16 %v397, %v396
    %v405 = vpack.c.b16 %v399, %v398
    %v406 = vpack.c.b16 %v401, %v400
    %v407 = vpack.c.b16 %v403, %v402
    %412 = vmatpush.bf16.msra.mxu0 0
    %413 = vmatpush.bf16.msra.mxu0 0
    %414 = vmatpush.bf16.msra.mxu0 0
    %415 = vmatpush.bf16.msra.mxu0 0
    %416 = vmatpush.bf16.msra.mxu0 %v407
    %417 = vmatpush.bf16.msra.mxu0 %v406
    %418 = vmatpush.bf16.msra.mxu0 %v405
    %419 = vmatpush.bf16.msra.mxu0 %v404
    %420 = vmatmul.bf16.gmra.mxu0 %v330
    %v421 = vpop.f32.mrf.mxu0
    %v422 = vadd.f32 %v386, %v421
    %v423 = vpop.f32.mrf.mxu0
    %424 = vdwg.mxu0
    %v425 = vadd.f32 %v194, %v342
    %v426 = vxor.u32 %v425, 2147483648
    %v427 = vmul.f32 %v426, 1.442695
    %v428 = vpow.pop %v427
    %v429 = vadd.f32 %v428, 1.0
    %v430 = vrcp.pop %v429
    %v431 = vmul.f32 %v429, %v430
    %v432 = vsub.f32 1.0, %v431
    %v433 = vmul.f32 %v430, %v432
    %v434 = vadd.f32 %v430, %v433
    %vm435 = vweird.f32 %v429
    %vm436 = vweird.f32 %v430
    %vm437 = vmor %vm435, %vm436
    %v438 = vsel %vm437, %v430, %v434
    %v439 = vand.u32 2147483647, %v429
    %vm440 = vcmp.eq.f32.partialorder %v439, 8.507059e+37
    %v441 = vand.u32 %v429, 2147483648
    %v442 = vor.u32 1.1754944e-38, %v441
    %v443 = vsel %vm440, %v442, %v438
    %v444 = vmul.f32 1.0, %v443
    %v445 = vadd.f32 %v230, %v382
    %v446 = vxor.u32 %v445, 2147483648
    %v447 = vmul.f32 %v446, 1.442695
    %v448 = vpow.pop %v447
    %v449 = vadd.f32 %v448, 1.0
    %v450 = vrcp.pop %v449
    %v451 = vmul.f32 %v449, %v450
    %v452 = vsub.f32 1.0, %v451
    %v453 = vmul.f32 %v450, %v452
    %v454 = vadd.f32 %v450, %v453
    %vm455 = vweird.f32 %v449
    %vm456 = vweird.f32 %v450
    %vm457 = vmor %vm455, %vm456
    %v458 = vsel %vm457, %v450, %v454
    %v459 = vand.u32 2147483647, %v449
    %vm460 = vcmp.eq.f32.partialorder %v459, 8.507059e+37
    %v461 = vand.u32 %v449, 2147483648
    %v462 = vor.u32 1.1754944e-38, %v461
    %v463 = vsel %vm460, %v462, %v458
    %v464 = vmul.f32 1.0, %v463
    %v465 = vmul.f32 %v444, %v422
    %v466 = vadd.f32 %v266, %v465
    %v467 = vtanh.pop %v466
    %v468 = vsub.f32 1.0, %v464
    %v469 = vmul.f32 %v468, %v467
    %v470 = vmul.f32 %v464, 0.0
    %v471 = vadd.f32 %v469, %v470
    %v473 = vrot.slane %v471, 1
    %vm475 = vcmask 516096
    %476 = vst.msk [vmem:[#allocation2] sm:$0x1] %vm475, %v471
    %477 = vst.msk [vmem:[#allocation2 + $0x8] sm:$0x1] %vm475, %v473
    %v478 = vpack.c.bf16 %v471, %v471
    %v480 = vsel %vm328, %v478, 0
    %482 = vmatpush.bf16.msra.mxu0 0
    %483 = vmatpush.bf16.msra.mxu0 0
    %484 = vmatpush.bf16.msra.mxu0 0
    %485 = vmatpush.bf16.msra.mxu0 0
    %486 = vmatpush.bf16.msra.mxu0 %v323
    %487 = vmatpush.bf16.msra.mxu0 %v322
    %488 = vmatpush.bf16.msra.mxu0 %v321
    %489 = vmatpush.bf16.msra.mxu0 %v320
    %490 = vmatmul.bf16.gmra.mxu0 %v480
    %v491 = vpop.f32.mrf.mxu0
    %v492 = vadd.f32 %v302, %v491
    %v493 = vpop.f32.mrf.mxu0
    %494 = vdwg.mxu0
    %495 = vmatpush.bf16.msra.mxu0 0
    %496 = vmatpush.bf16.msra.mxu0 0
    %497 = vmatpush.bf16.msra.mxu0 0
    %498 = vmatpush.bf16.msra.mxu0 0
    %499 = vmatpush.bf16.msra.mxu0 %v367
    %500 = vmatpush.bf16.msra.mxu0 %v366
    %501 = vmatpush.bf16.msra.mxu0 %v365
    %502 = vmatpush.bf16.msra.mxu0 %v364
    %503 = vmatmul.bf16.gmra.mxu0 %v480
    %v504 = vpop.f32.mrf.mxu0
    %v505 = vadd.f32 %v346, %v504
    %v506 = vpop.f32.mrf.mxu0
    %507 = vdwg.mxu0
    %508 = vmatpush.bf16.msra.mxu0 0
    %509 = vmatpush.bf16.msra.mxu0 0
    %510 = vmatpush.bf16.msra.mxu0 0
    %511 = vmatpush.bf16.msra.mxu0 0
    %512 = vmatpush.bf16.msra.mxu0 %v407
    %513 = vmatpush.bf16.msra.mxu0 %v406
    %514 = vmatpush.bf16.msra.mxu0 %v405
    %515 = vmatpush.bf16.msra.mxu0 %v404
    %516 = vmatmul.bf16.gmra.mxu0 %v480
    %v517 = vpop.f32.mrf.mxu0
    %v518 = vadd.f32 %v386, %v517
    %v519 = vpop.f32.mrf.mxu0
    %520 = vdwg.mxu0
    %v522 = vrot.slane %v492, 6
    %v524 = vadd.f32 %v194, %v522
    %v525 = vxor.u32 %v524, 2147483648
    %v526 = vmul.f32 %v525, 1.442695
    %v527 = vpow.pop %v526
    %v528 = vadd.f32 %v527, 1.0
    %v529 = vrcp.pop %v528
    %v530 = vmul.f32 %v528, %v529
    %v531 = vsub.f32 1.0, %v530
    %v532 = vmul.f32 %v529, %v531
    %v533 = vadd.f32 %v529, %v532
    %vm534 = vweird.f32 %v528
    %vm535 = vweird.f32 %v529
    %vm536 = vmor %vm534, %vm535
    %v537 = vsel %vm536, %v529, %v533
    %v538 = vand.u32 2147483647, %v528
    %vm539 = vcmp.eq.f32.partialorder %v538, 8.507059e+37
    %v540 = vand.u32 %v528, 2147483648
    %v541 = vor.u32 1.1754944e-38, %v540
    %v542 = vsel %vm539, %v541, %v537
    %v543 = vmul.f32 1.0, %v542
    %v545 = vrot.slane %v505, 6
    %v547 = vadd.f32 %v230, %v545
    %v548 = vxor.u32 %v547, 2147483648
    %v549 = vmul.f32 %v548, 1.442695
    %v550 = vpow.pop %v549
    %v551 = vadd.f32 %v550, 1.0
    %v552 = vrcp.pop %v551
    %v553 = vmul.f32 %v551, %v552
    %v554 = vsub.f32 1.0, %v553
    %v555 = vmul.f32 %v552, %v554
    %v556 = vadd.f32 %v552, %v555
    %vm557 = vweird.f32 %v551
    %vm558 = vweird.f32 %v552
    %vm559 = vmor %vm557, %vm558
    %v560 = vsel %vm559, %v552, %v556
    %v561 = vand.u32 2147483647, %v551
    %vm562 = vcmp.eq.f32.partialorder %v561, 8.507059e+37
    %v563 = vand.u32 %v551, 2147483648
    %v564 = vor.u32 1.1754944e-38, %v563
    %v565 = vsel %vm562, %v564, %v560
    %v566 = vmul.f32 1.0, %v565
    %v568 = vrot.slane %v518, 6
    %v570 = vmul.f32 %v543, %v568
    %v571 = vadd.f32 %v266, %v570
    %v572 = vtanh.pop %v571
    %v573 = vsub.f32 1.0, %v566
    %v574 = vmul.f32 %v573, %v572
    %v575 = vrot.slane %v471, 6
    %v577 = vmul.f32 %v566, %v575
    %v578 = vadd.f32 %v574, %v577
    %580 = vst [vmem:[#allocation1] sm:$0xff] %v578
    %s581 = scalar_lea.vmem [#allocation1], 2
    %v582 = vld [vmem:[%s581] ss:$9 sm:$0xff]
    %s583 = scalar_lea.vmem [#allocation1], 3
    %v584 = vld [vmem:[%s583] ss:$9 sm:$0xff]
    %587 = vst.msk [vmem:[#allocation2 + $0x1] sm:$0x1] %vm475, %v582
    %588 = vst.msk [vmem:[#allocation2 + $0x9] sm:$0x1] %vm475, %v584
    %v589 = vpack.c.bf16 %v578, %v578
    %v591 = vrot.slane %v589, 1
    %v593 = vsel %vm328, %v591, 0
    %595 = vmatpush.bf16.msra.mxu0 0
    %596 = vmatpush.bf16.msra.mxu0 0
    %597 = vmatpush.bf16.msra.mxu0 0
    %598 = vmatpush.bf16.msra.mxu0 0
    %599 = vmatpush.bf16.msra.mxu0 %v323
    %600 = vmatpush.bf16.msra.mxu0 %v322
    %601 = vmatpush.bf16.msra.mxu0 %v321
    %602 = vmatpush.bf16.msra.mxu0 %v320
    %603 = vmatmul.bf16.gmra.mxu0 %v593
    %v604 = vpop.f32.mrf.mxu0
    %v605 = vadd.f32 %v302, %v604
    %v606 = vpop.f32.mrf.mxu0
    %607 = vdwg.mxu0
    %608 = vmatpush.bf16.msra.mxu0 0
    %609 = vmatpush.bf16.msra.mxu0 0
    %610 = vmatpush.bf16.msra.mxu0 0
    %611 = vmatpush.bf16.msra.mxu0 0
    %612 = vmatpush.bf16.msra.mxu0 %v367
    %613 = vmatpush.bf16.msra.mxu0 %v366
    %614 = vmatpush.bf16.msra.mxu0 %v365
    %615 = vmatpush.bf16.msra.mxu0 %v364
    %616 = vmatmul.bf16.gmra.mxu0 %v593
    %v617 = vpop.f32.mrf.mxu0
    %v618 = vadd.f32 %v346, %v617
    %v619 = vpop.f32.mrf.mxu0
    %620 = vdwg.mxu0
    %621 = vmatpush.bf16.msra.mxu0 0
    %622 = vmatpush.bf16.msra.mxu0 0
    %623 = vmatpush.bf16.msra.mxu0 0
    %624 = vmatpush.bf16.msra.mxu0 0
    %625 = vmatpush.bf16.msra.mxu0 %v407
    %626 = vmatpush.bf16.msra.mxu0 %v406
    %627 = vmatpush.bf16.msra.mxu0 %v405
    %628 = vmatpush.bf16.msra.mxu0 %v404
    %629 = vmatmul.bf16.gmra.mxu0 %v593
    %v630 = vpop.f32.mrf.mxu0
    %v631 = vadd.f32 %v386, %v630
    %v632 = vpop.f32.mrf.mxu0
    %633 = vdwg.mxu0
    %v635 = vrot.slane %v605, 4
    %v637 = vadd.f32 %v194, %v635
    %v638 = vxor.u32 %v637, 2147483648
    %v639 = vmul.f32 %v638, 1.442695
    %v640 = vpow.pop %v639
    %v641 = vadd.f32 %v640, 1.0
    %v642 = vrcp.pop %v641
    %v643 = vmul.f32 %v641, %v642
    %v644 = vsub.f32 1.0, %v643
    %v645 = vmul.f32 %v642, %v644
    %v646 = vadd.f32 %v642, %v645
    %vm647 = vweird.f32 %v641
    %vm648 = vweird.f32 %v642
    %vm649 = vmor %vm647, %vm648
    %v650 = vsel %vm649, %v642, %v646
    %v651 = vand.u32 2147483647, %v641
    %vm652 = vcmp.eq.f32.partialorder %v651, 8.507059e+37
    %v653 = vand.u32 %v641, 2147483648
    %v654 = vor.u32 1.1754944e-38, %v653
    %v655 = vsel %vm652, %v654, %v650
    %v656 = vmul.f32 1.0, %v655
    %v658 = vrot.slane %v618, 4
    %v660 = vadd.f32 %v230, %v658
    %v661 = vxor.u32 %v660, 2147483648
    %v662 = vmul.f32 %v661, 1.442695
    %v663 = vpow.pop %v662
    %v664 = vadd.f32 %v663, 1.0
    %v665 = vrcp.pop %v664
    %v666 = vmul.f32 %v664, %v665
    %v667 = vsub.f32 1.0, %v666
    %v668 = vmul.f32 %v665, %v667
    %v669 = vadd.f32 %v665, %v668
    %vm670 = vweird.f32 %v664
    %vm671 = vweird.f32 %v665
    %vm672 = vmor %vm670, %vm671
    %v673 = vsel %vm672, %v665, %v669
    %v674 = vand.u32 2147483647, %v664
    %vm675 = vcmp.eq.f32.partialorder %v674, 8.507059e+37
    %v676 = vand.u32 %v664, 2147483648
    %v677 = vor.u32 1.1754944e-38, %v676
    %v678 = vsel %vm675, %v677, %v673
    %v679 = vmul.f32 1.0, %v678
    %v681 = vrot.slane %v631, 4
    %v683 = vmul.f32 %v656, %v681
    %v684 = vadd.f32 %v266, %v683
    %v685 = vtanh.pop %v684
    %v686 = vsub.f32 1.0, %v679
    %v687 = vmul.f32 %v686, %v685
    %v688 = vrot.slane %v578, 6
    %v690 = vmul.f32 %v679, %v688
    %v691 = vadd.f32 %v687, %v690
    %693 = vst [vmem:[#allocation1] sm:$0xff] %v691
    %s694 = scalar_lea.vmem [#allocation1], 4
    %v695 = vld [vmem:[%s694] ss:$9 sm:$0xff]
    %s696 = scalar_lea.vmem [#allocation1], 5
    %v697 = vld [vmem:[%s696] ss:$9 sm:$0xff]
    %700 = vst.msk [vmem:[#allocation2 + $0x2] sm:$0x1] %vm475, %v695
    %701 = vst.msk [vmem:[#allocation2 + $0xa] sm:$0x1] %vm475, %v697
    %v702 = vpack.c.bf16 %v691, %v691
    %v704 = vrot.slane %v702, 2
    %v706 = vsel %vm328, %v704, 0
    %708 = vmatpush.bf16.msra.mxu0 0
    %709 = vmatpush.bf16.msra.mxu0 0
    %710 = vmatpush.bf16.msra.mxu0 0
    %711 = vmatpush.bf16.msra.mxu0 0
    %712 = vmatpush.bf16.msra.mxu0 %v323
    %713 = vmatpush.bf16.msra.mxu0 %v322
    %714 = vmatpush.bf16.msra.mxu0 %v321
    %715 = vmatpush.bf16.msra.mxu0 %v320
    %716 = vmatmul.bf16.gmra.mxu0 %v706
    %v717 = vpop.f32.mrf.mxu0
    %v718 = vadd.f32 %v302, %v717
    %v719 = vpop.f32.mrf.mxu0
    %720 = vdwg.mxu0
    %721 = vmatpush.bf16.msra.mxu0 0
    %722 = vmatpush.bf16.msra.mxu0 0
    %723 = vmatpush.bf16.msra.mxu0 0
    %724 = vmatpush.bf16.msra.mxu0 0
    %725 = vmatpush.bf16.msra.mxu0 %v367
    %726 = vmatpush.bf16.msra.mxu0 %v366
    %727 = vmatpush.bf16.msra.mxu0 %v365
    %728 = vmatpush.bf16.msra.mxu0 %v364
    %729 = vmatmul.bf16.gmra.mxu0 %v706
    %v730 = vpop.f32.mrf.mxu0
    %v731 = vadd.f32 %v346, %v730
    %v732 = vpop.f32.mrf.mxu0
    %733 = vdwg.mxu0
    %734 = vmatpush.bf16.msra.mxu0 0
    %735 = vmatpush.bf16.msra.mxu0 0
    %736 = vmatpush.bf16.msra.mxu0 0
    %737 = vmatpush.bf16.msra.mxu0 0
    %738 = vmatpush.bf16.msra.mxu0 %v407
    %739 = vmatpush.bf16.msra.mxu0 %v406
    %740 = vmatpush.bf16.msra.mxu0 %v405
    %741 = vmatpush.bf16.msra.mxu0 %v404
    %742 = vmatmul.bf16.gmra.mxu0 %v706
    %v743 = vpop.f32.mrf.mxu0
    %v744 = vadd.f32 %v386, %v743
    %v745 = vpop.f32.mrf.mxu0
    %746 = vdwg.mxu0
    %v748 = vrot.slane %v718, 2
    %v750 = vadd.f32 %v194, %v748
    %v751 = vxor.u32 %v750, 2147483648
    %v752 = vmul.f32 %v751, 1.442695
    %v753 = vpow.pop %v752
    %v754 = vadd.f32 %v753, 1.0
    %v755 = vrcp.pop %v754
    %v756 = vmul.f32 %v754, %v755
    %v757 = vsub.f32 1.0, %v756
    %v758 = vmul.f32 %v755, %v757
    %v759 = vadd.f32 %v755, %v758
    %vm760 = vweird.f32 %v754
    %vm761 = vweird.f32 %v755
    %vm762 = vmor %vm760, %vm761
    %v763 = vsel %vm762, %v755, %v759
    %v764 = vand.u32 2147483647, %v754
    %vm765 = vcmp.eq.f32.partialorder %v764, 8.507059e+37
    %v766 = vand.u32 %v754, 2147483648
    %v767 = vor.u32 1.1754944e-38, %v766
    %v768 = vsel %vm765, %v767, %v763
    %v769 = vmul.f32 1.0, %v768
    %v771 = vrot.slane %v731, 2
    %v773 = vadd.f32 %v230, %v771
    %v774 = vxor.u32 %v773, 2147483648
    %v775 = vmul.f32 %v774, 1.442695
    %v776 = vpow.pop %v775
    %v777 = vadd.f32 %v776, 1.0
    %v778 = vrcp.pop %v777
    %v779 = vmul.f32 %v777, %v778
    %v780 = vsub.f32 1.0, %v779
    %v781 = vmul.f32 %v778, %v780
    %v782 = vadd.f32 %v778, %v781
    %vm783 = vweird.f32 %v777
    %vm784 = vweird.f32 %v778
    %vm785 = vmor %vm783, %vm784
    %v786 = vsel %vm785, %v778, %v782
    %v787 = vand.u32 2147483647, %v777
    %vm788 = vcmp.eq.f32.partialorder %v787, 8.507059e+37
    %v789 = vand.u32 %v777, 2147483648
    %v790 = vor.u32 1.1754944e-38, %v789
    %v791 = vsel %vm788, %v790, %v786
    %v792 = vmul.f32 1.0, %v791
    %v794 = vrot.slane %v744, 2
    %v796 = vmul.f32 %v769, %v794
    %v797 = vadd.f32 %v266, %v796
    %v798 = vtanh.pop %v797
    %v799 = vsub.f32 1.0, %v792
    %v800 = vmul.f32 %v799, %v798
    %v801 = vrot.slane %v691, 6
    %v803 = vmul.f32 %v792, %v801
    %v804 = vadd.f32 %v800, %v803
    %806 = vst [vmem:[#allocation1] sm:$0xff] %v804
    %s807 = scalar_lea.vmem [#allocation1], 6
    %v808 = vld [vmem:[%s807] ss:$9 sm:$0xff]
    %s809 = scalar_lea.vmem [#allocation1], 7
    %v810 = vld [vmem:[%s809] ss:$9 sm:$0xff]
    %813 = vst.msk [vmem:[#allocation2 + $0x3] sm:$0x1] %vm475, %v808
    %814 = vst.msk [vmem:[#allocation2 + $0xb] sm:$0x1] %vm475, %v810
    %v815 = vpack.c.bf16 %v804, %v804
    %v817 = vrot.slane %v815, 3
    %v819 = vsel %vm328, %v817, 0
    %821 = vmatpush.bf16.msra.mxu0 0
    %822 = vmatpush.bf16.msra.mxu0 0
    %823 = vmatpush.bf16.msra.mxu0 0
    %824 = vmatpush.bf16.msra.mxu0 0
    %825 = vmatpush.bf16.msra.mxu0 %v323
    %826 = vmatpush.bf16.msra.mxu0 %v322
    %827 = vmatpush.bf16.msra.mxu0 %v321
    %828 = vmatpush.bf16.msra.mxu0 %v320
    %829 = vmatmul.bf16.gmra.mxu0 %v819
    %v830 = vpop.f32.mrf.mxu0
    %v831 = vadd.f32 %v302, %v830
    %v832 = vpop.f32.mrf.mxu0
    %833 = vdwg.mxu0
    %834 = vmatpush.bf16.msra.mxu0 0
    %835 = vmatpush.bf16.msra.mxu0 0
    %836 = vmatpush.bf16.msra.mxu0 0
    %837 = vmatpush.bf16.msra.mxu0 0
    %838 = vmatpush.bf16.msra.mxu0 %v367
    %839 = vmatpush.bf16.msra.mxu0 %v366
    %840 = vmatpush.bf16.msra.mxu0 %v365
    %841 = vmatpush.bf16.msra.mxu0 %v364
    %842 = vmatmul.bf16.gmra.mxu0 %v819
    %v843 = vpop.f32.mrf.mxu0
    %v844 = vadd.f32 %v346, %v843
    %v845 = vpop.f32.mrf.mxu0
    %846 = vdwg.mxu0
    %847 = vmatpush.bf16.msra.mxu0 0
    %848 = vmatpush.bf16.msra.mxu0 0
    %849 = vmatpush.bf16.msra.mxu0 0
    %850 = vmatpush.bf16.msra.mxu0 0
    %851 = vmatpush.bf16.msra.mxu0 %v407
    %852 = vmatpush.bf16.msra.mxu0 %v406
    %853 = vmatpush.bf16.msra.mxu0 %v405
    %854 = vmatpush.bf16.msra.mxu0 %v404
    %855 = vmatmul.bf16.gmra.mxu0 %v819
    %v856 = vpop.f32.mrf.mxu0
    %v857 = vadd.f32 %v386, %v856
    %v858 = vpop.f32.mrf.mxu0
    %859 = vdwg.mxu0
    %v860 = vadd.f32 %v196, %v831
    %v861 = vxor.u32 %v860, 2147483648
    %v862 = vmul.f32 %v861, 1.442695
    %v863 = vpow.pop %v862
    %v864 = vadd.f32 %v863, 1.0
    %v865 = vrcp.pop %v864
    %v866 = vmul.f32 %v864, %v865
    %v867 = vsub.f32 1.0, %v866
    %v868 = vmul.f32 %v865, %v867
    %v869 = vadd.f32 %v865, %v868
    %vm870 = vweird.f32 %v864
    %vm871 = vweird.f32 %v865
    %vm872 = vmor %vm870, %vm871
    %v873 = vsel %vm872, %v865, %v869
    %v874 = vand.u32 2147483647, %v864
    %vm875 = vcmp.eq.f32.partialorder %v874, 8.507059e+37
    %v876 = vand.u32 %v864, 2147483648
    %v877 = vor.u32 1.1754944e-38, %v876
    %v878 = vsel %vm875, %v877, %v873
    %v879 = vmul.f32 1.0, %v878
    %v880 = vadd.f32 %v232, %v844
    %v881 = vxor.u32 %v880, 2147483648
    %v882 = vmul.f32 %v881, 1.442695
    %v883 = vpow.pop %v882
    %v884 = vadd.f32 %v883, 1.0
    %v885 = vrcp.pop %v884
    %v886 = vmul.f32 %v884, %v885
    %v887 = vsub.f32 1.0, %v886
    %v888 = vmul.f32 %v885, %v887
    %v889 = vadd.f32 %v885, %v888
    %vm890 = vweird.f32 %v884
    %vm891 = vweird.f32 %v885
    %vm892 = vmor %vm890, %vm891
    %v893 = vsel %vm892, %v885, %v889
    %v894 = vand.u32 2147483647, %v884
    %vm895 = vcmp.eq.f32.partialorder %v894, 8.507059e+37
    %v896 = vand.u32 %v884, 2147483648
    %v897 = vor.u32 1.1754944e-38, %v896
    %v898 = vsel %vm895, %v897, %v893
    %v899 = vmul.f32 1.0, %v898
    %v900 = vmul.f32 %v879, %v857
    %v901 = vadd.f32 %v268, %v900
    %v902 = vtanh.pop %v901
    %v903 = vsub.f32 1.0, %v899
    %v904 = vmul.f32 %v903, %v902
    %v905 = vrot.slane %v804, 6
    %v907 = vmul.f32 %v899, %v905
    %v908 = vadd.f32 %v904, %v907
    %v910 = vrot.slane %v908, 1
    %912 = vst.msk [vmem:[#allocation2 + $0x4] sm:$0x1] %vm475, %v908
    %913 = vst.msk [vmem:[#allocation2 + $0xc] sm:$0x1] %vm475, %v910
    %v914 = vpack.c.bf16 %v908, %v908
    %v916 = vsel %vm328, %v914, 0
    %918 = vmatpush.bf16.msra.mxu0 0
    %919 = vmatpush.bf16.msra.mxu0 0
    %920 = vmatpush.bf16.msra.mxu0 0
    %921 = vmatpush.bf16.msra.mxu0 0
    %922 = vmatpush.bf16.msra.mxu0 %v323
    %923 = vmatpush.bf16.msra.mxu0 %v322
    %924 = vmatpush.bf16.msra.mxu0 %v321
    %925 = vmatpush.bf16.msra.mxu0 %v320
    %926 = vmatmul.bf16.gmra.mxu0 %v916
    %v927 = vpop.f32.mrf.mxu0
    %v928 = vadd.f32 %v302, %v927
    %v929 = vpop.f32.mrf.mxu0
    %930 = vdwg.mxu0
    %931 = vmatpush.bf16.msra.mxu0 0
    %932 = vmatpush.bf16.msra.mxu0 0
    %933 = vmatpush.bf16.msra.mxu0 0
    %934 = vmatpush.bf16.msra.mxu0 0
    %935 = vmatpush.bf16.msra.mxu0 %v367
    %936 = vmatpush.bf16.msra.mxu0 %v366
    %937 = vmatpush.bf16.msra.mxu0 %v365
    %938 = vmatpush.bf16.msra.mxu0 %v364
    %939 = vmatmul.bf16.gmra.mxu0 %v916
    %v940 = vpop.f32.mrf.mxu0
    %v941 = vadd.f32 %v346, %v940
    %v942 = vpop.f32.mrf.mxu0
    %943 = vdwg.mxu0
    %944 = vmatpush.bf16.msra.mxu0 0
    %945 = vmatpush.bf16.msra.mxu0 0
    %946 = vmatpush.bf16.msra.mxu0 0
    %947 = vmatpush.bf16.msra.mxu0 0
    %948 = vmatpush.bf16.msra.mxu0 %v407
    %949 = vmatpush.bf16.msra.mxu0 %v406
    %950 = vmatpush.bf16.msra.mxu0 %v405
    %951 = vmatpush.bf16.msra.mxu0 %v404
    %952 = vmatmul.bf16.gmra.mxu0 %v916
    %v953 = vpop.f32.mrf.mxu0
    %v954 = vadd.f32 %v386, %v953
    %v955 = vpop.f32.mrf.mxu0
    %956 = vdwg.mxu0
    %v958 = vrot.slane %v928, 6
    %v960 = vadd.f32 %v196, %v958
    %v961 = vxor.u32 %v960, 2147483648
    %v962 = vmul.f32 %v961, 1.442695
    %v963 = vpow.pop %v962
    %v964 = vadd.f32 %v963, 1.0
    %v965 = vrcp.pop %v964
    %v966 = vmul.f32 %v964, %v965
    %v967 = vsub.f32 1.0, %v966
    %v968 = vmul.f32 %v965, %v967
    %v969 = vadd.f32 %v965, %v968
    %vm970 = vweird.f32 %v964
    %vm971 = vweird.f32 %v965
    %vm972 = vmor %vm970, %vm971
    %v973 = vsel %vm972, %v965, %v969
    %v974 = vand.u32 2147483647, %v964
    %vm975 = vcmp.eq.f32.partialorder %v974, 8.507059e+37
    %v976 = vand.u32 %v964, 2147483648
    %v977 = vor.u32 1.1754944e-38, %v976
    %v978 = vsel %vm975, %v977, %v973
    %v979 = vmul.f32 1.0, %v978
    %v981 = vrot.slane %v941, 6
    %v983 = vadd.f32 %v232, %v981
    %v984 = vxor.u32 %v983, 2147483648
    %v985 = vmul.f32 %v984, 1.442695
    %v986 = vpow.pop %v985
    %v987 = vadd.f32 %v986, 1.0
    %v988 = vrcp.pop %v987
    %v989 = vmul.f32 %v987, %v988
    %v990 = vsub.f32 1.0, %v989
    %v991 = vmul.f32 %v988, %v990
    %v992 = vadd.f32 %v988, %v991
    %vm993 = vweird.f32 %v987
    %vm994 = vweird.f32 %v988
    %vm995 = vmor %vm993, %vm994
    %v996 = vsel %vm995, %v988, %v992
    %v997 = vand.u32 2147483647, %v987
    %vm998 = vcmp.eq.f32.partialorder %v997, 8.507059e+37
    %v999 = vand.u32 %v987, 2147483648
    %v1000 = vor.u32 1.1754944e-38, %v999
    %v1001 = vsel %vm998, %v1000, %v996
    %v1002 = vmul.f32 1.0, %v1001
    %v1004 = vrot.slane %v954, 6
    %v1006 = vmul.f32 %v979, %v1004
    %v1007 = vadd.f32 %v268, %v1006
    %v1008 = vtanh.pop %v1007
    %v1009 = vsub.f32 1.0, %v1002
    %v1010 = vmul.f32 %v1009, %v1008
    %v1011 = vrot.slane %v908, 6
    %v1013 = vmul.f32 %v1002, %v1011
    %v1014 = vadd.f32 %v1010, %v1013
    %1016 = vst [vmem:[#allocation1] sm:$0xff] %v1014
    %s1017 = scalar_lea.vmem [#allocation1], 2
    %v1018 = vld [vmem:[%s1017] ss:$9 sm:$0xff]
    %s1019 = scalar_lea.vmem [#allocation1], 3
    %v1020 = vld [vmem:[%s1019] ss:$9 sm:$0xff]
    %1023 = vst.msk [vmem:[#allocation2 + $0x5] sm:$0x1] %vm475, %v1018
    %1024 = vst.msk [vmem:[#allocation2 + $0xd] sm:$0x1] %vm475, %v1020
    %v1025 = vpack.c.bf16 %v1014, %v1014
    %v1027 = vrot.slane %v1025, 1
    %v1029 = vsel %vm328, %v1027, 0
    %1031 = vmatpush.bf16.msra.mxu0 0
    %1032 = vmatpush.bf16.msra.mxu0 0
    %1033 = vmatpush.bf16.msra.mxu0 0
    %1034 = vmatpush.bf16.msra.mxu0 0
    %1035 = vmatpush.bf16.msra.mxu0 %v323
    %1036 = vmatpush.bf16.msra.mxu0 %v322
    %1037 = vmatpush.bf16.msra.mxu0 %v321
    %1038 = vmatpush.bf16.msra.mxu0 %v320
    %1039 = vmatmul.bf16.gmra.mxu0 %v1029
    %v1040 = vpop.f32.mrf.mxu0
    %v1041 = vadd.f32 %v302, %v1040
    %v1042 = vpop.f32.mrf.mxu0
    %1043 = vdwg.mxu0
    %1044 = vmatpush.bf16.msra.mxu0 0
    %1045 = vmatpush.bf16.msra.mxu0 0
    %1046 = vmatpush.bf16.msra.mxu0 0
    %1047 = vmatpush.bf16.msra.mxu0 0
    %1048 = vmatpush.bf16.msra.mxu0 %v367
    %1049 = vmatpush.bf16.msra.mxu0 %v366
    %1050 = vmatpush.bf16.msra.mxu0 %v365
    %1051 = vmatpush.bf16.msra.mxu0 %v364
    %1052 = vmatmul.bf16.gmra.mxu0 %v1029
    %v1053 = vpop.f32.mrf.mxu0
    %v1054 = vadd.f32 %v346, %v1053
    %v1055 = vpop.f32.mrf.mxu0
    %1056 = vdwg.mxu0
    %1057 = vmatpush.bf16.msra.mxu0 0
    %1058 = vmatpush.bf16.msra.mxu0 0
    %1059 = vmatpush.bf16.msra.mxu0 0
    %1060 = vmatpush.bf16.msra.mxu0 0
    %1061 = vmatpush.bf16.msra.mxu0 %v407
    %1062 = vmatpush.bf16.msra.mxu0 %v406
    %1063 = vmatpush.bf16.msra.mxu0 %v405
    %1064 = vmatpush.bf16.msra.mxu0 %v404
    %1065 = vmatmul.bf16.gmra.mxu0 %v1029
    %v1066 = vpop.f32.mrf.mxu0
    %v1067 = vadd.f32 %v386, %v1066
    %v1068 = vpop.f32.mrf.mxu0
    %1069 = vdwg.mxu0
    %v1071 = vrot.slane %v1041, 4
    %v1073 = vadd.f32 %v196, %v1071
    %v1074 = vxor.u32 %v1073, 2147483648
    %v1075 = vmul.f32 %v1074, 1.442695
    %v1076 = vpow.pop %v1075
    %v1077 = vadd.f32 %v1076, 1.0
    %v1078 = vrcp.pop %v1077
    %v1079 = vmul.f32 %v1077, %v1078
    %v1080 = vsub.f32 1.0, %v1079
    %v1081 = vmul.f32 %v1078, %v1080
    %v1082 = vadd.f32 %v1078, %v1081
    %vm1083 = vweird.f32 %v1077
    %vm1084 = vweird.f32 %v1078
    %vm1085 = vmor %vm1083, %vm1084
    %v1086 = vsel %vm1085, %v1078, %v1082
    %v1087 = vand.u32 2147483647, %v1077
    %vm1088 = vcmp.eq.f32.partialorder %v1087, 8.507059e+37
    %v1089 = vand.u32 %v1077, 2147483648
    %v1090 = vor.u32 1.1754944e-38, %v1089
    %v1091 = vsel %vm1088, %v1090, %v1086
    %v1092 = vmul.f32 1.0, %v1091
    %v1094 = vrot.slane %v1054, 4
    %v1096 = vadd.f32 %v232, %v1094
    %v1097 = vxor.u32 %v1096, 2147483648
    %v1098 = vmul.f32 %v1097, 1.442695
    %v1099 = vpow.pop %v1098
    %v1100 = vadd.f32 %v1099, 1.0
    %v1101 = vrcp.pop %v1100
    %v1102 = vmul.f32 %v1100, %v1101
    %v1103 = vsub.f32 1.0, %v1102
    %v1104 = vmul.f32 %v1101, %v1103
    %v1105 = vadd.f32 %v1101, %v1104
    %vm1106 = vweird.f32 %v1100
    %vm1107 = vweird.f32 %v1101
    %vm1108 = vmor %vm1106, %vm1107
    %v1109 = vsel %vm1108, %v1101, %v1105
    %v1110 = vand.u32 2147483647, %v1100
    %vm1111 = vcmp.eq.f32.partialorder %v1110, 8.507059e+37
    %v1112 = vand.u32 %v1100, 2147483648
    %v1113 = vor.u32 1.1754944e-38, %v1112
    %v1114 = vsel %vm1111, %v1113, %v1109
    %v1115 = vmul.f32 1.0, %v1114
    %v1117 = vrot.slane %v1067, 4
    %v1119 = vmul.f32 %v1092, %v1117
    %v1120 = vadd.f32 %v268, %v1119
    %v1121 = vtanh.pop %v1120
    %v1122 = vsub.f32 1.0, %v1115
    %v1123 = vmul.f32 %v1122, %v1121
    %v1124 = vrot.slane %v1014, 6
    %v1126 = vmul.f32 %v1115, %v1124
    %v1127 = vadd.f32 %v1123, %v1126
    %1129 = vst [vmem:[#allocation1] sm:$0xff] %v1127
    %s1130 = scalar_lea.vmem [#allocation1], 4
    %v1131 = vld [vmem:[%s1130] ss:$9 sm:$0xff]
    %s1132 = scalar_lea.vmem [#allocation1], 5
    %v1133 = vld [vmem:[%s1132] ss:$9 sm:$0xff]
    %1136 = vst.msk [vmem:[#allocation2 + $0x6] sm:$0x1] %vm475, %v1131
    %1137 = vst.msk [vmem:[#allocation2 + $0xe] sm:$0x1] %vm475, %v1133
    %v1138 = vpack.c.bf16 %v1127, %v1127
    %v1140 = vrot.slane %v1138, 2
    %v1142 = vsel %vm328, %v1140, 0
    %1144 = vmatpush.bf16.msra.mxu0 0
    %1145 = vmatpush.bf16.msra.mxu0 0
    %1146 = vmatpush.bf16.msra.mxu0 0
    %1147 = vmatpush.bf16.msra.mxu0 0
    %1148 = vmatpush.bf16.msra.mxu0 %v323
    %1149 = vmatpush.bf16.msra.mxu0 %v322
    %1150 = vmatpush.bf16.msra.mxu0 %v321
    %1151 = vmatpush.bf16.msra.mxu0 %v320
    %1152 = vmatmul.bf16.gmra.mxu0 %v1142
    %v1153 = vpop.f32.mrf.mxu0
    %v1154 = vadd.f32 %v302, %v1153
    %v1155 = vpop.f32.mrf.mxu0
    %1156 = vdwg.mxu0
    %1157 = vmatpush.bf16.msra.mxu0 0
    %1158 = vmatpush.bf16.msra.mxu0 0
    %1159 = vmatpush.bf16.msra.mxu0 0
    %1160 = vmatpush.bf16.msra.mxu0 0
    %1161 = vmatpush.bf16.msra.mxu0 %v367
    %1162 = vmatpush.bf16.msra.mxu0 %v366
    %1163 = vmatpush.bf16.msra.mxu0 %v365
    %1164 = vmatpush.bf16.msra.mxu0 %v364
    %1165 = vmatmul.bf16.gmra.mxu0 %v1142
    %v1166 = vpop.f32.mrf.mxu0
    %v1167 = vadd.f32 %v346, %v1166
    %v1168 = vpop.f32.mrf.mxu0
    %1169 = vdwg.mxu0
    %1170 = vmatpush.bf16.msra.mxu0 0
    %1171 = vmatpush.bf16.msra.mxu0 0
    %1172 = vmatpush.bf16.msra.mxu0 0
    %1173 = vmatpush.bf16.msra.mxu0 0
    %1174 = vmatpush.bf16.msra.mxu0 %v407
    %1175 = vmatpush.bf16.msra.mxu0 %v406
    %1176 = vmatpush.bf16.msra.mxu0 %v405
    %1177 = vmatpush.bf16.msra.mxu0 %v404
    %1178 = vmatmul.bf16.gmra.mxu0 %v1142
    %v1179 = vpop.f32.mrf.mxu0
    %v1180 = vadd.f32 %v386, %v1179
    %v1181 = vpop.f32.mrf.mxu0
    %1182 = vdwg.mxu0
    %v1184 = vrot.slane %v1154, 2
    %v1186 = vadd.f32 %v196, %v1184
    %v1187 = vxor.u32 %v1186, 2147483648
    %v1188 = vmul.f32 %v1187, 1.442695
    %v1189 = vpow.pop %v1188
    %v1190 = vadd.f32 %v1189, 1.0
    %v1191 = vrcp.pop %v1190
    %v1192 = vmul.f32 %v1190, %v1191
    %v1193 = vsub.f32 1.0, %v1192
    %v1194 = vmul.f32 %v1191, %v1193
    %v1195 = vadd.f32 %v1191, %v1194
    %vm1196 = vweird.f32 %v1190
    %vm1197 = vweird.f32 %v1191
    %vm1198 = vmor %vm1196, %vm1197
    %v1199 = vsel %vm1198, %v1191, %v1195
    %v1200 = vand.u32 2147483647, %v1190
    %vm1201 = vcmp.eq.f32.partialorder %v1200, 8.507059e+37
    %v1202 = vand.u32 %v1190, 2147483648
    %v1203 = vor.u32 1.1754944e-38, %v1202
    %v1204 = vsel %vm1201, %v1203, %v1199
    %v1205 = vmul.f32 1.0, %v1204
    %v1207 = vrot.slane %v1167, 2
    %v1209 = vadd.f32 %v232, %v1207
    %v1210 = vxor.u32 %v1209, 2147483648
    %v1211 = vmul.f32 %v1210, 1.442695
    %v1212 = vpow.pop %v1211
    %v1213 = vadd.f32 %v1212, 1.0
    %v1214 = vrcp.pop %v1213
    %v1215 = vmul.f32 %v1213, %v1214
    %v1216 = vsub.f32 1.0, %v1215
    %v1217 = vmul.f32 %v1214, %v1216
    %v1218 = vadd.f32 %v1214, %v1217
    %vm1219 = vweird.f32 %v1213
    %vm1220 = vweird.f32 %v1214
    %vm1221 = vmor %vm1219, %vm1220
    %v1222 = vsel %vm1221, %v1214, %v1218
    %v1223 = vand.u32 2147483647, %v1213
    %vm1224 = vcmp.eq.f32.partialorder %v1223, 8.507059e+37
    %v1225 = vand.u32 %v1213, 2147483648
    %v1226 = vor.u32 1.1754944e-38, %v1225
    %v1227 = vsel %vm1224, %v1226, %v1222
    %v1228 = vmul.f32 1.0, %v1227
    %v1230 = vrot.slane %v1180, 2
    %v1232 = vmul.f32 %v1205, %v1230
    %v1233 = vadd.f32 %v268, %v1232
    %v1234 = vtanh.pop %v1233
    %v1235 = vsub.f32 1.0, %v1228
    %v1236 = vmul.f32 %v1235, %v1234
    %v1237 = vrot.slane %v1127, 6
    %v1239 = vmul.f32 %v1228, %v1237
    %v1240 = vadd.f32 %v1236, %v1239
    %1242 = vst [vmem:[#allocation1] sm:$0xff] %v1240
    %s1243 = scalar_lea.vmem [#allocation1], 6
    %v1244 = vld [vmem:[%s1243] ss:$9 sm:$0xff]
    %s1245 = scalar_lea.vmem [#allocation1], 7
    %v1246 = vld [vmem:[%s1245] ss:$9 sm:$0xff]
    %1249 = vst.msk [vmem:[#allocation2 + $0x7] sm:$0x1] %vm475, %v1244
    %1250 = vst.msk [vmem:[#allocation2 + $0xf] sm:$0x1] %vm475, %v1246
    %v1251 = vld [vmem:[#allocation2] sm:$0xff]
    %v1252 = vld [vmem:[#allocation2 + $0x8] sm:$0xff]
    %v1253 = vld [vmem:[%s5] sm:$0xf]
    %v1254 = vld [vmem:[%s5 + $0x4] sm:$0xf]
    %v1255 = vld [vmem:[%s5 + $0x8] sm:$0xf]
    %v1256 = vld [vmem:[%s5 + $0xc] sm:$0xf]
    %v1257 = vld [vmem:[%s5 + $0x10] sm:$0xf]
    %v1258 = vld [vmem:[%s5 + $0x14] sm:$0xf]
    %v1259 = vld [vmem:[%s5 + $0x18] sm:$0xf]
    %v1260 = vld [vmem:[%s5 + $0x1c] sm:$0xf]
    %v1261 = vpack.c.bf16 %v1252, %v1251
    %v1262 = vld [vmem:[#allocation6] sm:$0x1]
    %v1264 = vperm.slane %v1262, 0
    %v1274 = vunpack.c.l.b16 %v1253
    %v1275 = vunpack.c.l.b16 %v1254
    %v1276 = vunpack.c.l.b16 %v1255
    %v1277 = vunpack.c.l.b16 %v1256
    %v1278 = vunpack.c.l.b16 %v1257
    %v1279 = vunpack.c.l.b16 %v1258
    %v1280 = vunpack.c.l.b16 %v1259
    %v1281 = vunpack.c.l.b16 %v1260
    %v1282 = vpack.c.b16 %v1275, %v1274
    %v1283 = vpack.c.b16 %v1277, %v1276
    %v1284 = vpack.c.b16 %v1279, %v1278
    %v1285 = vpack.c.b16 %v1281, %v1280
    %v1291 = vsel %vm328, %v1261, 0
    %1293 = vmatpush.bf16.msra.mxu0 0
    %1294 = vmatpush.bf16.msra.mxu0 0
    %1295 = vmatpush.bf16.msra.mxu0 0
    %1296 = vmatpush.bf16.msra.mxu0 0
    %1297 = vmatpush.bf16.msra.mxu0 %v1285
    %1298 = vmatpush.bf16.msra.mxu0 %v1284
    %1299 = vmatpush.bf16.msra.mxu0 %v1283
    %1300 = vmatpush.bf16.msra.mxu0 %v1282
    %1301 = vmatmul.bf16.gmra.mxu0 %v1291
    %v1302 = vpop.f32.mrf.mxu0
    %v1303 = vadd.f32 %v1264, %v1302
    %v1304 = vpop.f32.mrf.mxu0
    %v1305 = vadd.f32 %v1264, %v1304
    %1306 = vdwg.mxu0
    %v1307 = vld [vmem:[%s7] sm:$0xf]
    %v1308 = vld [vmem:[%s7 + $0x4] sm:$0xf]
    %v1309 = vld [vmem:[%s7 + $0x8] sm:$0xf]
    %v1310 = vld [vmem:[%s7 + $0xc] sm:$0xf]
    %v1311 = vld [vmem:[%s7 + $0x10] sm:$0xf]
    %v1312 = vld [vmem:[%s7 + $0x14] sm:$0xf]
    %v1313 = vld [vmem:[%s7 + $0x18] sm:$0xf]
    %v1314 = vld [vmem:[%s7 + $0x1c] sm:$0xf]
    %v1315 = vld [vmem:[%s8] sm:$0x1]
    %v1317 = vperm.slane %v1315, 0
    %v1327 = vunpack.c.l.b16 %v1307
    %v1328 = vunpack.c.l.b16 %v1308
    %v1329 = vunpack.c.l.b16 %v1309
    %v1330 = vunpack.c.l.b16 %v1310
    %v1331 = vunpack.c.l.b16 %v1311
    %v1332 = vunpack.c.l.b16 %v1312
    %v1333 = vunpack.c.l.b16 %v1313
    %v1334 = vunpack.c.l.b16 %v1314
    %v1335 = vpack.c.b16 %v1328, %v1327
    %v1336 = vpack.c.b16 %v1330, %v1329
    %v1337 = vpack.c.b16 %v1332, %v1331
    %v1338 = vpack.c.b16 %v1334, %v1333
    %1343 = vmatpush.bf16.msra.mxu0 0
    %1344 = vmatpush.bf16.msra.mxu0 0
    %1345 = vmatpush.bf16.msra.mxu0 0
    %1346 = vmatpush.bf16.msra.mxu0 0
    %1347 = vmatpush.bf16.msra.mxu0 %v1338
    %1348 = vmatpush.bf16.msra.mxu0 %v1337
    %1349 = vmatpush.bf16.msra.mxu0 %v1336
    %1350 = vmatpush.bf16.msra.mxu0 %v1335
    %1351 = vmatmul.bf16.gmra.mxu0 %v1291
    %v1352 = vpop.f32.mrf.mxu0
    %v1353 = vadd.f32 %v1317, %v1352
    %v1354 = vpop.f32.mrf.mxu0
    %v1355 = vadd.f32 %v1317, %v1354
    %1356 = vdwg.mxu0
    %v1358 = vsel %vm328, %v1303, 0
    %v1361 = vsel %vm328, %v1353, 0
    %1363 = vmatpush.xpose.msra.mxu0 0.0
    %1364 = vmatpush.xpose.msra.mxu0 0.0
    %1365 = vmatpush.xpose.msra.mxu0 0.0
    %1366 = vmatpush.xpose.msra.mxu0 0.0
    %1367 = vmatpush.xpose.msra.mxu0 0.0
    %1368 = vmatpush.xpose.msra.mxu0 0.0
    %1369 = vmatpush.xpose.msra.mxu0 0.0
    %1370 = vmatpush.xpose.msra.mxu0 0.0
    %1371 = vmatpush.xpose.msra.mxu0 0.0
    %1372 = vmatpush.xpose.msra.mxu0 0.0
    %1373 = vmatpush.xpose.msra.mxu0 0.0
    %1374 = vmatpush.xpose.msra.mxu0 0.0
    %1375 = vmatpush.xpose.msra.mxu0 0.0
    %1376 = vmatpush.xpose.msra.mxu0 0.0
    %1377 = vmatpush.xpose.msra.mxu0 0.0
    %1378 = vmatpush.xpose.msra.mxu0 %v1361
    %1379 = vmatmul.f32.gmra.mxu0 %v1358
    %v1380 = vpop.f32.mrf.mxu0
    %v1381 = vadd.f32 0.0, %v1380
    %1382 = vdwg.mxu0
    %v1384 = vsel %vm328, %v1305, 0
    %v1387 = vsel %vm328, %v1355, 0
    %1389 = vmatpush.xpose.msra.mxu0 0.0
    %1390 = vmatpush.xpose.msra.mxu0 0.0
    %1391 = vmatpush.xpose.msra.mxu0 0.0
    %1392 = vmatpush.xpose.msra.mxu0 0.0
    %1393 = vmatpush.xpose.msra.mxu0 0.0
    %1394 = vmatpush.xpose.msra.mxu0 0.0
    %1395 = vmatpush.xpose.msra.mxu0 0.0
    %1396 = vmatpush.xpose.msra.mxu0 0.0
    %1397 = vmatpush.xpose.msra.mxu0 0.0
    %1398 = vmatpush.xpose.msra.mxu0 0.0
    %1399 = vmatpush.xpose.msra.mxu0 0.0
    %1400 = vmatpush.xpose.msra.mxu0 0.0
    %1401 = vmatpush.xpose.msra.mxu0 0.0
    %1402 = vmatpush.xpose.msra.mxu0 0.0
    %1403 = vmatpush.xpose.msra.mxu0 0.0
    %1404 = vmatpush.xpose.msra.mxu0 %v1387
    %1405 = vmatmul.f32.gmra.mxu0 %v1384
    %v1406 = vpop.f32.mrf.mxu0
    %v1407 = vadd.f32 0.0, %v1406
    %1408 = vdwg.mxu0
    %v1409 = vmul.f32 %v1381, 0.125
    %v1410 = vmul.f32 %v1407, 0.125
    %v1411 = vld [vmem:[#allocation8] sm:$0xff]
    %v1412 = vld [vmem:[#allocation8 + $0x8] sm:$0xff]
    %vm1413 = vcmp.gt.f32.partialorder %v1411, 0.0
    %vm1414 = vcmp.gt.f32.partialorder %v1412, 0.0
    %v1415 = vsel %vm1413, %v1409, -1e+30
    %v1416 = vsel %vm1414, %v1410, -1e+30
    %vm1417 = vcmask 64512
    %v1418 = vsel %vm1417, %v1415, -inf
    %1419 = vmax.xlane.f32.xlu0 %v1418
    %v1420 = vpop.xlane.xlu0 %1419
    %v1421 = vsel %vm1417, %v1416, -inf
    %1422 = vmax.xlane.f32.xlu0 %v1421
    %v1423 = vpop.xlane.xlu0 %1422
    %v1424 = vsub.f32 %v1415, %v1420
    %v1425 = vsub.f32 %v1416, %v1423
    %v1426 = vmul.f32 %v1424, 1.442695
    %v1427 = vpow.pop %v1426
    %v1428 = vmul.f32 %v1425, 1.442695
    %v1429 = vpow.pop %v1428
    %v1430 = vsel %vm1413, %v1427, 0.0
    %v1431 = vsel %vm1414, %v1429, 0.0
    %v1432 = vsel %vm1417, %v1430, 0.0
    %1433 = vadd.xlane.f32.xlu0 %v1432
    %v1434 = vpop.xlane.xlu0 %1433
    %v1435 = vsel %vm1417, %v1431, 0.0
    %1436 = vadd.xlane.f32.xlu0 %v1435
    %v1437 = vpop.xlane.xlu0 %1436
    %v1438 = vmax.f32 %v1434, 1e-20
    %v1439 = vmax.f32 %v1437, 1e-20
    %v1440 = vrcp.pop %v1438
    %v1441 = vrcp.pop %v1439
    %v1442 = vmul.f32 %v1430, %v1440
    %v1443 = vmul.f32 %v1431, %v1441
    %1444 = vst.msk [vmem:[#allocation14] sm:$0xff] %vm1417, %v1442
    %1445 = vst.msk [vmem:[#allocation14 + $0x8] sm:$0xff] %vm1417, %v1443
    %v1446 = vld [vmem:[#allocation9] sm:$0xff]
    %v1447 = vld [vmem:[#allocation9 + $0x8] sm:$0xff]
    %v1448 = vmul.f32 %v1442, %v1446
    %v1449 = vmul.f32 %v1443, %v1447
    %v1450 = vld [vmem:[#allocation11] sm:$0xff]
    %v1451 = vld [vmem:[#allocation11 + $0x8] sm:$0xff]
    %v1452 = vmul.f32 %v1442, %v1450
    %v1453 = vmul.f32 %v1443, %v1451
    %v1455 = vsel %vm1417, %v1448, 0
    %1457 = vmatpush.msra.mxu0 0.0
    %1458 = vmatpush.msra.mxu0 0.0
    %1459 = vmatpush.msra.mxu0 0.0
    %1460 = vmatpush.msra.mxu0 0.0
    %1461 = vmatpush.msra.mxu0 0.0
    %1462 = vmatpush.msra.mxu0 0.0
    %1463 = vmatpush.msra.mxu0 0.0
    %1464 = vmatpush.msra.mxu0 0.0
    %1465 = vmatpush.msra.mxu0 0.0
    %1466 = vmatpush.msra.mxu0 0.0
    %1467 = vmatpush.msra.mxu0 0.0
    %1468 = vmatpush.msra.mxu0 0.0
    %1469 = vmatpush.msra.mxu0 0.0
    %1470 = vmatpush.msra.mxu0 0.0
    %1471 = vmatpush.msra.mxu0 0.0
    %1472 = vmatpush.msra.mxu0 %v1251
    %1473 = vmatmul.f32.gmra.mxu0 %v1455
    %v1474 = vpop.f32.mrf.mxu0
    %v1475 = vadd.f32 0.0, %v1474
    %1476 = vdwg.mxu0
    %v1478 = vsel %vm1417, %v1449, 0
    %1480 = vmatpush.msra.mxu0 0.0
    %1481 = vmatpush.msra.mxu0 0.0
    %1482 = vmatpush.msra.mxu0 0.0
    %1483 = vmatpush.msra.mxu0 0.0
    %1484 = vmatpush.msra.mxu0 0.0
    %1485 = vmatpush.msra.mxu0 0.0
    %1486 = vmatpush.msra.mxu0 0.0
    %1487 = vmatpush.msra.mxu0 0.0
    %1488 = vmatpush.msra.mxu0 0.0
    %1489 = vmatpush.msra.mxu0 0.0
    %1490 = vmatpush.msra.mxu0 0.0
    %1491 = vmatpush.msra.mxu0 0.0
    %1492 = vmatpush.msra.mxu0 0.0
    %1493 = vmatpush.msra.mxu0 0.0
    %1494 = vmatpush.msra.mxu0 0.0
    %1495 = vmatpush.msra.mxu0 %v1252
    %1496 = vmatmul.f32.gmra.mxu0 %v1478
    %v1497 = vpop.f32.mrf.mxu0
    %v1498 = vadd.f32 0.0, %v1497
    %1499 = vdwg.mxu0
    %v1501 = vsel %vm1417, %v1452, 0
    %1503 = vmatpush.msra.mxu0 0.0
    %1504 = vmatpush.msra.mxu0 0.0
    %1505 = vmatpush.msra.mxu0 0.0
    %1506 = vmatpush.msra.mxu0 0.0
    %1507 = vmatpush.msra.mxu0 0.0
    %1508 = vmatpush.msra.mxu0 0.0
    %1509 = vmatpush.msra.mxu0 0.0
    %1510 = vmatpush.msra.mxu0 0.0
    %1511 = vmatpush.msra.mxu0 0.0
    %1512 = vmatpush.msra.mxu0 0.0
    %1513 = vmatpush.msra.mxu0 0.0
    %1514 = vmatpush.msra.mxu0 0.0
    %1515 = vmatpush.msra.mxu0 0.0
    %1516 = vmatpush.msra.mxu0 0.0
    %1517 = vmatpush.msra.mxu0 0.0
    %1518 = vmatpush.msra.mxu0 %v1251
    %1519 = vmatmul.f32.gmra.mxu0 %v1501
    %v1520 = vpop.f32.mrf.mxu0
    %v1521 = vadd.f32 0.0, %v1520
    %1522 = vdwg.mxu0
    %v1524 = vsel %vm1417, %v1453, 0
    %1526 = vmatpush.msra.mxu0 0.0
    %1527 = vmatpush.msra.mxu0 0.0
    %1528 = vmatpush.msra.mxu0 0.0
    %1529 = vmatpush.msra.mxu0 0.0
    %1530 = vmatpush.msra.mxu0 0.0
    %1531 = vmatpush.msra.mxu0 0.0
    %1532 = vmatpush.msra.mxu0 0.0
    %1533 = vmatpush.msra.mxu0 0.0
    %1534 = vmatpush.msra.mxu0 0.0
    %1535 = vmatpush.msra.mxu0 0.0
    %1536 = vmatpush.msra.mxu0 0.0
    %1537 = vmatpush.msra.mxu0 0.0
    %1538 = vmatpush.msra.mxu0 0.0
    %1539 = vmatpush.msra.mxu0 0.0
    %1540 = vmatpush.msra.mxu0 0.0
    %1541 = vmatpush.msra.mxu0 %v1252
    %1542 = vmatmul.f32.gmra.mxu0 %v1524
    %v1543 = vpop.f32.mrf.mxu0
    %v1544 = vadd.f32 0.0, %v1543
    %1545 = vdwg.mxu0
    %1548 = vrot.lane.b32.xlu0 %v1521, 64
    %v1549 = vpop.permute.xlu0 %1548
    %1550 = vrot.lane.b32.xlu0 %v1544, 64
    %v1551 = vpop.permute.xlu0 %1550
    %v1554 = vsel %vm328, %v1475, %v1549
    %v1555 = vsel %vm328, %v1498, %v1551
    %v1556 = vld [vmem:[%s12] sm:$0xf]
    %v1557 = vld [vmem:[%s12 + $0x4] sm:$0xf]
    %v1558 = vld [vmem:[%s12 + $0x8] sm:$0xf]
    %v1559 = vld [vmem:[%s12 + $0xc] sm:$0xf]
    %v1560 = vld [vmem:[%s12 + $0x10] sm:$0xf]
    %v1561 = vld [vmem:[%s12 + $0x14] sm:$0xf]
    %v1562 = vld [vmem:[%s12 + $0x18] sm:$0xf]
    %v1563 = vld [vmem:[%s12 + $0x1c] sm:$0xf]
    %v1564 = vld [vmem:[%s12 + $0x20] sm:$0xf]
    %v1565 = vld [vmem:[%s12 + $0x24] sm:$0xf]
    %v1566 = vld [vmem:[%s12 + $0x28] sm:$0xf]
    %v1567 = vld [vmem:[%s12 + $0x2c] sm:$0xf]
    %v1568 = vld [vmem:[%s12 + $0x30] sm:$0xf]
    %v1569 = vld [vmem:[%s12 + $0x34] sm:$0xf]
    %v1570 = vld [vmem:[%s12 + $0x38] sm:$0xf]
    %v1571 = vld [vmem:[%s12 + $0x3c] sm:$0xf]
    %v1572 = vpack.c.bf16 %v1555, %v1554
    %v1589 = vunpack.c.l.b16 %v1556
    %v1590 = vunpack.c.l.b16 %v1557
    %v1591 = vunpack.c.l.b16 %v1558
    %v1592 = vunpack.c.l.b16 %v1559
    %v1593 = vunpack.c.l.b16 %v1560
    %v1594 = vunpack.c.l.b16 %v1561
    %v1595 = vunpack.c.l.b16 %v1562
    %v1596 = vunpack.c.l.b16 %v1563
    %v1597 = vunpack.c.l.b16 %v1564
    %v1598 = vunpack.c.l.b16 %v1565
    %v1599 = vunpack.c.l.b16 %v1566
    %v1600 = vunpack.c.l.b16 %v1567
    %v1601 = vunpack.c.l.b16 %v1568
    %v1602 = vunpack.c.l.b16 %v1569
    %v1603 = vunpack.c.l.b16 %v1570
    %v1604 = vunpack.c.l.b16 %v1571
    %v1605 = vpack.c.b16 %v1590, %v1589
    %v1606 = vpack.c.b16 %v1592, %v1591
    %v1607 = vpack.c.b16 %v1594, %v1593
    %v1608 = vpack.c.b16 %v1596, %v1595
    %v1609 = vpack.c.b16 %v1598, %v1597
    %v1610 = vpack.c.b16 %v1600, %v1599
    %v1611 = vpack.c.b16 %v1602, %v1601
    %v1612 = vpack.c.b16 %v1604, %v1603
    %1621 = vmatpush.bf16.msra.mxu0 %v1612
    %1622 = vmatpush.bf16.msra.mxu0 %v1611
    %1623 = vmatpush.bf16.msra.mxu0 %v1610
    %1624 = vmatpush.bf16.msra.mxu0 %v1609
    %1625 = vmatpush.bf16.msra.mxu0 %v1608
    %1626 = vmatpush.bf16.msra.mxu0 %v1607
    %1627 = vmatpush.bf16.msra.mxu0 %v1606
    %1628 = vmatpush.bf16.msra.mxu0 %v1605
    %1629 = vmatmul.bf16.gmra.mxu0 %v1572
    %v1630 = vpop.f32.mrf.mxu0
    %v1631 = vadd.f32 0.0, %v1630
    %v1632 = vpop.f32.mrf.mxu0
    %v1633 = vadd.f32 0.0, %v1632
    %1634 = vdwg.mxu0
    %v1635 = vxor.u32 %v1631, 2147483648
    %v1636 = vxor.u32 %v1633, 2147483648
    %v1637 = vmul.f32 %v1635, 1.442695
    %v1638 = vpow.pop %v1637
    %v1639 = vmul.f32 %v1636, 1.442695
    %v1640 = vpow.pop %v1639
    %v1641 = vadd.f32 %v1638, 1.0
    %v1642 = vadd.f32 %v1640, 1.0
    %v1643 = vrcp.pop %v1641
    %v1644 = vmul.f32 %v1641, %v1643
    %v1645 = vsub.f32 1.0, %v1644
    %v1646 = vmul.f32 %v1643, %v1645
    %v1647 = vadd.f32 %v1643, %v1646
    %vm1648 = vweird.f32 %v1641
    %vm1649 = vweird.f32 %v1643
    %vm1650 = vmor %vm1648, %vm1649
    %v1651 = vsel %vm1650, %v1643, %v1647
    %v1652 = vand.u32 2147483647, %v1641
    %vm1653 = vcmp.eq.f32.partialorder %v1652, 8.507059e+37
    %v1654 = vand.u32 %v1641, 2147483648
    %v1655 = vor.u32 1.1754944e-38, %v1654
    %v1656 = vsel %vm1653, %v1655, %v1651
    %v1657 = vmul.f32 1.0, %v1656
    %v1658 = vrcp.pop %v1642
    %v1659 = vmul.f32 %v1642, %v1658
    %v1660 = vsub.f32 1.0, %v1659
    %v1661 = vmul.f32 %v1658, %v1660
    %v1662 = vadd.f32 %v1658, %v1661
    %vm1663 = vweird.f32 %v1642
    %vm1664 = vweird.f32 %v1658
    %vm1665 = vmor %vm1663, %vm1664
    %v1666 = vsel %vm1665, %v1658, %v1662
    %v1667 = vand.u32 2147483647, %v1642
    %vm1668 = vcmp.eq.f32.partialorder %v1667, 8.507059e+37
    %v1669 = vand.u32 %v1642, 2147483648
    %v1670 = vor.u32 1.1754944e-38, %v1669
    %v1671 = vsel %vm1668, %v1670, %v1666
    %v1672 = vmul.f32 1.0, %v1671
    %1673 = vmatpush.msra.mxu0 0.0
    %1674 = vmatpush.msra.mxu0 0.0
    %1675 = vmatpush.msra.mxu0 0.0
    %1676 = vmatpush.msra.mxu0 0.0
    %1677 = vmatpush.msra.mxu0 0.0
    %1678 = vmatpush.msra.mxu0 0.0
    %1679 = vmatpush.msra.mxu0 0.0
    %1680 = vmatpush.msra.mxu0 0.0
    %1681 = vmatpush.msra.mxu0 0.0
    %1682 = vmatpush.msra.mxu0 0.0
    %1683 = vmatpush.msra.mxu0 0.0
    %1684 = vmatpush.msra.mxu0 0.0
    %1685 = vmatpush.msra.mxu0 0.0
    %1686 = vmatpush.msra.mxu0 0.0
    %1687 = vmatpush.msra.mxu0 0.0
    %1688 = vmatpush.msra.mxu0 %v1657
    %1689 = vmatmul.f32.gmra.mxu0 %v1455
    %v1690 = vpop.f32.mrf.mxu0
    %v1691 = vadd.f32 0.0, %v1690
    %1692 = vdwg.mxu0
    %1693 = vmatpush.msra.mxu0 0.0
    %1694 = vmatpush.msra.mxu0 0.0
    %1695 = vmatpush.msra.mxu0 0.0
    %1696 = vmatpush.msra.mxu0 0.0
    %1697 = vmatpush.msra.mxu0 0.0
    %1698 = vmatpush.msra.mxu0 0.0
    %1699 = vmatpush.msra.mxu0 0.0
    %1700 = vmatpush.msra.mxu0 0.0
    %1701 = vmatpush.msra.mxu0 0.0
    %1702 = vmatpush.msra.mxu0 0.0
    %1703 = vmatpush.msra.mxu0 0.0
    %1704 = vmatpush.msra.mxu0 0.0
    %1705 = vmatpush.msra.mxu0 0.0
    %1706 = vmatpush.msra.mxu0 0.0
    %1707 = vmatpush.msra.mxu0 0.0
    %1708 = vmatpush.msra.mxu0 %v1672
    %1709 = vmatmul.f32.gmra.mxu0 %v1478
    %v1710 = vpop.f32.mrf.mxu0
    %v1711 = vadd.f32 0.0, %v1710
    %1712 = vdwg.mxu0
    %1713 = vmatpush.msra.mxu0 0.0
    %1714 = vmatpush.msra.mxu0 0.0
    %1715 = vmatpush.msra.mxu0 0.0
    %1716 = vmatpush.msra.mxu0 0.0
    %1717 = vmatpush.msra.mxu0 0.0
    %1718 = vmatpush.msra.mxu0 0.0
    %1719 = vmatpush.msra.mxu0 0.0
    %1720 = vmatpush.msra.mxu0 0.0
    %1721 = vmatpush.msra.mxu0 0.0
    %1722 = vmatpush.msra.mxu0 0.0
    %1723 = vmatpush.msra.mxu0 0.0
    %1724 = vmatpush.msra.mxu0 0.0
    %1725 = vmatpush.msra.mxu0 0.0
    %1726 = vmatpush.msra.mxu0 0.0
    %1727 = vmatpush.msra.mxu0 0.0
    %1728 = vmatpush.msra.mxu0 %v1657
    %1729 = vmatmul.f32.gmra.mxu0 %v1501
    %v1730 = vpop.f32.mrf.mxu0
    %v1731 = vadd.f32 0.0, %v1730
    %1732 = vdwg.mxu0
    %1733 = vmatpush.msra.mxu0 0.0
    %1734 = vmatpush.msra.mxu0 0.0
    %1735 = vmatpush.msra.mxu0 0.0
    %1736 = vmatpush.msra.mxu0 0.0
    %1737 = vmatpush.msra.mxu0 0.0
    %1738 = vmatpush.msra.mxu0 0.0
    %1739 = vmatpush.msra.mxu0 0.0
    %1740 = vmatpush.msra.mxu0 0.0
    %1741 = vmatpush.msra.mxu0 0.0
    %1742 = vmatpush.msra.mxu0 0.0
    %1743 = vmatpush.msra.mxu0 0.0
    %1744 = vmatpush.msra.mxu0 0.0
    %1745 = vmatpush.msra.mxu0 0.0
    %1746 = vmatpush.msra.mxu0 0.0
    %1747 = vmatpush.msra.mxu0 0.0
    %1748 = vmatpush.msra.mxu0 %v1672
    %1749 = vmatmul.f32.gmra.mxu0 %v1524
    %v1750 = vpop.f32.mrf.mxu0
    %v1751 = vadd.f32 0.0, %v1750
    %1752 = vdwg.mxu0
    %1755 = vrot.lane.b32.xlu0 %v1731, 64
    %v1756 = vpop.permute.xlu0 %1755
    %1757 = vrot.lane.b32.xlu0 %v1751, 64
    %v1758 = vpop.permute.xlu0 %1757
    %v1761 = vsel %vm328, %v1691, %v1756
    %v1762 = vsel %vm328, %v1711, %v1758
    %v1763 = vld [vmem:[%s13] sm:$0xf]
    %v1764 = vld [vmem:[%s13 + $0x4] sm:$0xf]
    %v1765 = vld [vmem:[%s13 + $0x8] sm:$0xf]
    %v1766 = vld [vmem:[%s13 + $0xc] sm:$0xf]
    %v1767 = vld [vmem:[%s13 + $0x10] sm:$0xf]
    %v1768 = vld [vmem:[%s13 + $0x14] sm:$0xf]
    %v1769 = vld [vmem:[%s13 + $0x18] sm:$0xf]
    %v1770 = vld [vmem:[%s13 + $0x1c] sm:$0xf]
    %v1771 = vld [vmem:[%s13 + $0x20] sm:$0xf]
    %v1772 = vld [vmem:[%s13 + $0x24] sm:$0xf]
    %v1773 = vld [vmem:[%s13 + $0x28] sm:$0xf]
    %v1774 = vld [vmem:[%s13 + $0x2c] sm:$0xf]
    %v1775 = vld [vmem:[%s13 + $0x30] sm:$0xf]
    %v1776 = vld [vmem:[%s13 + $0x34] sm:$0xf]
    %v1777 = vld [vmem:[%s13 + $0x38] sm:$0xf]
    %v1778 = vld [vmem:[%s13 + $0x3c] sm:$0xf]
    %v1779 = vpack.c.bf16 %v1762, %v1761
    %v1796 = vunpack.c.l.b16 %v1763
    %v1797 = vunpack.c.l.b16 %v1764
    %v1798 = vunpack.c.l.b16 %v1765
    %v1799 = vunpack.c.l.b16 %v1766
    %v1800 = vunpack.c.l.b16 %v1767
    %v1801 = vunpack.c.l.b16 %v1768
    %v1802 = vunpack.c.l.b16 %v1769
    %v1803 = vunpack.c.l.b16 %v1770
    %v1804 = vunpack.c.l.b16 %v1771
    %v1805 = vunpack.c.l.b16 %v1772
    %v1806 = vunpack.c.l.b16 %v1773
    %v1807 = vunpack.c.l.b16 %v1774
    %v1808 = vunpack.c.l.b16 %v1775
    %v1809 = vunpack.c.l.b16 %v1776
    %v1810 = vunpack.c.l.b16 %v1777
    %v1811 = vunpack.c.l.b16 %v1778
    %v1812 = vpack.c.b16 %v1797, %v1796
    %v1813 = vpack.c.b16 %v1799, %v1798
    %v1814 = vpack.c.b16 %v1801, %v1800
    %v1815 = vpack.c.b16 %v1803, %v1802
    %v1816 = vpack.c.b16 %v1805, %v1804
    %v1817 = vpack.c.b16 %v1807, %v1806
    %v1818 = vpack.c.b16 %v1809, %v1808
    %v1819 = vpack.c.b16 %v1811, %v1810
    %1828 = vmatpush.bf16.msra.mxu0 %v1819
    %1829 = vmatpush.bf16.msra.mxu0 %v1818
    %1830 = vmatpush.bf16.msra.mxu0 %v1817
    %1831 = vmatpush.bf16.msra.mxu0 %v1816
    %1832 = vmatpush.bf16.msra.mxu0 %v1815
    %1833 = vmatpush.bf16.msra.mxu0 %v1814
    %1834 = vmatpush.bf16.msra.mxu0 %v1813
    %1835 = vmatpush.bf16.msra.mxu0 %v1812
    %1836 = vmatmul.bf16.gmra.mxu0 %v1779
    %v1837 = vpop.f32.mrf.mxu0
    %v1838 = vadd.f32 0.0, %v1837
    %v1839 = vpop.f32.mrf.mxu0
    %v1840 = vadd.f32 0.0, %v1839
    %1841 = vdwg.mxu0
    %1844 = vrot.lane.b32.xlu0 %v1838, 64
    %v1845 = vpop.permute.xlu0 %1844
    %1846 = vrot.lane.b32.xlu0 %v1840, 64
    %v1847 = vpop.permute.xlu0 %1846
    %v1850 = vsel %vm328, %v1251, %v1845
    %v1851 = vsel %vm328, %v1252, %v1847
    %1852 = vst [vmem:[#allocation15] sm:$0xff] %v1850
    %1853 = vst [vmem:[#allocation15 + $0x8] sm:$0xff] %v1851
    %v1854 = vld [vmem:[%s14] sm:$0xf]
    %v1855 = vld [vmem:[%s14 + $0x4] sm:$0xf]
    %v1856 = vld [vmem:[%s14 + $0x8] sm:$0xf]
    %v1857 = vld [vmem:[%s14 + $0xc] sm:$0xf]
    %v1858 = vld [vmem:[%s14 + $0x10] sm:$0xf]
    %v1859 = vld [vmem:[%s14 + $0x14] sm:$0xf]
    %v1860 = vld [vmem:[%s14 + $0x18] sm:$0xf]
    %v1861 = vld [vmem:[%s14 + $0x1c] sm:$0xf]
    %v1862 = vld [vmem:[%s14 + $0x20] sm:$0xf]
    %v1863 = vld [vmem:[%s14 + $0x24] sm:$0xf]
    %v1864 = vld [vmem:[%s14 + $0x28] sm:$0xf]
    %v1865 = vld [vmem:[%s14 + $0x2c] sm:$0xf]
    %v1866 = vld [vmem:[%s14 + $0x30] sm:$0xf]
    %v1867 = vld [vmem:[%s14 + $0x34] sm:$0xf]
    %v1868 = vld [vmem:[%s14 + $0x38] sm:$0xf]
    %v1869 = vld [vmem:[%s14 + $0x3c] sm:$0xf]
    %v1870 = vpack.c.bf16 %v1851, %v1850
    %v1871 = vld [vmem:[%s15] sm:$0x1]
    %v1873 = vperm.slane %v1871, 0
    %v1891 = vunpack.c.l.b16 %v1854
    %v1892 = vunpack.c.l.b16 %v1855
    %v1893 = vunpack.c.l.b16 %v1856
    %v1894 = vunpack.c.l.b16 %v1857
    %v1895 = vunpack.c.l.b16 %v1858
    %v1896 = vunpack.c.l.b16 %v1859
    %v1897 = vunpack.c.l.b16 %v1860
    %v1898 = vunpack.c.l.b16 %v1861
    %v1899 = vunpack.c.l.b16 %v1862
    %v1900 = vunpack.c.l.b16 %v1863
    %v1901 = vunpack.c.l.b16 %v1864
    %v1902 = vunpack.c.l.b16 %v1865
    %v1903 = vunpack.c.l.b16 %v1866
    %v1904 = vunpack.c.l.b16 %v1867
    %v1905 = vunpack.c.l.b16 %v1868
    %v1906 = vunpack.c.l.b16 %v1869
    %v1907 = vpack.c.b16 %v1892, %v1891
    %v1908 = vpack.c.b16 %v1894, %v1893
    %v1909 = vpack.c.b16 %v1896, %v1895
    %v1910 = vpack.c.b16 %v1898, %v1897
    %v1911 = vpack.c.b16 %v1900, %v1899
    %v1912 = vpack.c.b16 %v1902, %v1901
    %v1913 = vpack.c.b16 %v1904, %v1903
    %v1914 = vpack.c.b16 %v1906, %v1905
    %1923 = vmatpush.bf16.msra.mxu0 %v1914
    %1924 = vmatpush.bf16.msra.mxu0 %v1913
    %1925 = vmatpush.bf16.msra.mxu0 %v1912
    %1926 = vmatpush.bf16.msra.mxu0 %v1911
    %1927 = vmatpush.bf16.msra.mxu0 %v1910
    %1928 = vmatpush.bf16.msra.mxu0 %v1909
    %1929 = vmatpush.bf16.msra.mxu0 %v1908
    %1930 = vmatpush.bf16.msra.mxu0 %v1907
    %1931 = vmatmul.bf16.gmra.mxu0 %v1870
    %v1932 = vpop.f32.mrf.mxu0
    %v1933 = vadd.f32 %v1873, %v1932
    %v1934 = vpop.f32.mrf.mxu0
    %v1935 = vadd.f32 %v1873, %v1934
    %1936 = vdwg.mxu0
    %v1937 = vmax.f32 %v1933, 0.0
    %v1938 = vmax.f32 %v1935, 0.0
    %v1939 = vld [vmem:[#allocation12] sm:$0xf]
    %v1940 = vld [vmem:[#allocation12 + $0x4] sm:$0xf]
    %v1941 = vld [vmem:[#allocation12 + $0x8] sm:$0xf]
    %v1942 = vld [vmem:[#allocation12 + $0xc] sm:$0xf]
    %v1943 = vld [vmem:[#allocation12 + $0x10] sm:$0xf]
    %v1944 = vld [vmem:[#allocation12 + $0x14] sm:$0xf]
    %v1945 = vld [vmem:[#allocation12 + $0x18] sm:$0xf]
    %v1946 = vld [vmem:[#allocation12 + $0x1c] sm:$0xf]
    %v1947 = vpack.c.bf16 %v1938, %v1937
    %v1948 = vld [vmem:[%s17] sm:$0x1]
    %v1950 = vperm.slane %v1948, 0
    %v1960 = vunpack.c.l.b16 %v1939
    %v1961 = vunpack.c.l.b16 %v1940
    %v1962 = vunpack.c.l.b16 %v1941
    %v1963 = vunpack.c.l.b16 %v1942
    %v1964 = vunpack.c.l.b16 %v1943
    %v1965 = vunpack.c.l.b16 %v1944
    %v1966 = vunpack.c.l.b16 %v1945
    %v1967 = vunpack.c.l.b16 %v1946
    %v1968 = vpack.c.b16 %v1961, %v1960
    %v1969 = vpack.c.b16 %v1963, %v1962
    %v1970 = vpack.c.b16 %v1965, %v1964
    %v1971 = vpack.c.b16 %v1967, %v1966
    %v1977 = vsel %vm328, %v1947, 0
    %1979 = vmatpush.bf16.msra.mxu0 0
    %1980 = vmatpush.bf16.msra.mxu0 0
    %1981 = vmatpush.bf16.msra.mxu0 0
    %1982 = vmatpush.bf16.msra.mxu0 0
    %1983 = vmatpush.bf16.msra.mxu0 %v1971
    %1984 = vmatpush.bf16.msra.mxu0 %v1970
    %1985 = vmatpush.bf16.msra.mxu0 %v1969
    %1986 = vmatpush.bf16.msra.mxu0 %v1968
    %1987 = vmatmul.bf16.gmra.mxu0 %v1977
    %v1988 = vpop.f32.mrf.mxu0
    %v1989 = vadd.f32 %v1950, %v1988
    %v1990 = vpop.f32.mrf.mxu0
    %v1991 = vadd.f32 %v1950, %v1990
    %1992 = vdwg.mxu0
    %1993 = vmax.xlane.f32.xlu0 %v1989
    %v1994 = vpop.xlane.xlu0 %1993
    %1995 = vmax.xlane.f32.xlu0 %v1991
    %v1996 = vpop.xlane.xlu0 %1995
    %v1997 = vsub.f32 %v1989, %v1994
    %v1998 = vsub.f32 %v1991, %v1996
    %v1999 = vmul.f32 %v1997, 1.442695
    %v2000 = vpow.pop %v1999
    %v2001 = vmul.f32 %v1998, 1.442695
    %v2002 = vpow.pop %v2001
    %2003 = vadd.xlane.f32.xlu0 %v2000
    %v2004 = vpop.xlane.xlu0 %2003
    %2005 = vadd.xlane.f32.xlu0 %v2002
    %v2006 = vpop.xlane.xlu0 %2005
    %v2007 = vlog2.pop %v2004
    %v2008 = vmul.f32 %v2007, 0.6931472
    %v2009 = vlog2.pop %v2006
    %v2010 = vmul.f32 %v2009, 0.6931472
    %v2011 = vadd.f32 %v2008, %v1994
    %v2012 = vadd.f32 %v2010, %v1996
    %v2013 = vsub.f32 %v1989, %v2011
    %v2014 = vsub.f32 %v1991, %v2012
    %2015 = vst [vmem:[#allocation17] sm:$0xff] %v2013
    %2016 = vst [vmem:[#allocation17 + $0x8] sm:$0xff] %v2014
    // Predicated region
    $region98: #{tpu_custom_call.1} parent=1 // pred_check
      _
    $region99: #{tpu_custom_call.1} parent=1 // pred_check_branch
      %2018 = sbr.rel (0) target = $region101
    $region100: #{tpu_custom_call.1} parent=1 // pred_region
      %2020 = vsyncadd [#allocation5], 0
      %s2021 = sshll.u32 [#allocation14], 4
      %s2022 = int_to_ptr.vmem [resolvable:$true] %s2021
      %s2023 = sshll.u32 %s18, 4
      %s2024 = int_to_ptr.hbm [resolvable:$true] %s2023
      %2029 = dma.vmem_to_hbm [thread:$0]  %s2022, 256, %s2024, [#allocation5], 128, 128, 8
    $region101: #{tpu_custom_call.1} parent=1 // pred_fallthru
      _
    // Predicated region
    $region102: #{tpu_custom_call.1} parent=1 // pred_check
      _
    $region103: #{tpu_custom_call.1} parent=1 // pred_check_branch
      %2031 = sbr.rel (0) target = $region105
    $region104: #{tpu_custom_call.1} parent=1 // pred_region
      %2033 = vsyncadd [#allocation16], 0
      %s2034 = sshll.u32 [#allocation15], 4
      %s2035 = int_to_ptr.vmem [resolvable:$true] %s2034
      %s2036 = sshll.u32 %s19, 4
      %s2037 = int_to_ptr.hbm [resolvable:$true] %s2036
      %2042 = dma.vmem_to_hbm [thread:$0]  %s2035, 256, %s2037, [#allocation16], 128, 128, 8
    $region105: #{tpu_custom_call.1} parent=1 // pred_fallthru
      _
    // Predicated region
    $region106: #{tpu_custom_call.1} parent=1 // pred_check
      _
    $region107: #{tpu_custom_call.1} parent=1 // pred_check_branch
      %2044 = sbr.rel (0) target = $region109
    $region108: #{tpu_custom_call.1} parent=1 // pred_region
      %2046 = vsyncadd [#allocation16], 0
      %s2047 = sshll.u32 [#allocation17], 4
      %s2048 = int_to_ptr.vmem [resolvable:$true] %s2047
      %s2049 = sshll.u32 %s20, 4
      %s2050 = int_to_ptr.hbm [resolvable:$true] %s2049
      %2055 = dma.vmem_to_hbm [thread:$0]  %s2048, 256, %s2050, [#allocation16], 128, 128, 8
    $region109: #{tpu_custom_call.1} parent=1 // pred_fallthru
      _
    // Predicated region
    $region110: #{tpu_custom_call.1} parent=1 // pred_check
      _
    $region111: #{tpu_custom_call.1} parent=1 // pred_check_branch
      %2057 = sbr.rel (0) target = $region113
    $region112: #{tpu_custom_call.1} parent=1 // pred_region
      %2059 = dma.done [#allocation5], 256
    $region113: #{tpu_custom_call.1} parent=1 // pred_fallthru
      _
    // Predicated region
    $region114: #{tpu_custom_call.1} parent=1 // pred_check
      _
    $region115: #{tpu_custom_call.1} parent=1 // pred_check_branch
      %2061 = sbr.rel (0) target = $region117
    $region116: #{tpu_custom_call.1} parent=1 // pred_region
      %2063 = dma.done [#allocation16], 256
    $region117: #{tpu_custom_call.1} parent=1 // pred_fallthru
      _
    // Predicated region
    $region118: #{tpu_custom_call.1} parent=1 // pred_check
      _
    $region119: #{tpu_custom_call.1} parent=1 // pred_check_branch
      %2065 = sbr.rel (0) target = $region121
    $region120: #{tpu_custom_call.1} parent=1 // pred_region
      %2067 = dma.done [#allocation16], 256
    $region121: #{tpu_custom_call.1} parent=1 // pred_fallthru
      _
    %2068 = vsyncpa [#allocation4], 1
    %2069 = vsyncpa [#allocation7], 1
    %2070 = vsyncpa [#allocation10], 1
    %2071 = vsyncpa [#allocation13], 1
    %2072 = vsyncpa [#allocation5], 1
    %2073 = vsyncpa [#allocation16], 1

</llo_original>
